<compile_context>
chip_gen: v7x
topology: tpu7x:2x2x1
jax: 0.10.0
libtpu: 0.0.40
codegen_flags: <defaults>
</compile_context>

<pallas_src>
import functools

import jax
import jax.numpy as jnp
from jax import lax
from jax.experimental import pallas as pl
from jax.experimental.pallas import tpu as pltpu


# ----------------------------------------------------------------------------
# tiling helpers (static shapes only)
# ----------------------------------------------------------------------------
def _pick_stmt_tile(n_stmts, target=256):
    """Largest multiple of 8 <= target dividing n_stmts, else the full extent."""
    if n_stmts <= target:
        return n_stmts
    t = (target // 8) * 8
    while t >= 8:
        if n_stmts % t == 0:
            return t
        t -= 8
    return n_stmts


def _pick_batch_tile(b2):
    """Split the 2B batch into two 8-aligned tiles when possible (v7x megacore)."""
    if b2 >= 16 and b2 % 16 == 0:
        return b2 // 2
    return b2


# ----------------------------------------------------------------------------
# Kernel 1: statement encoder + hoisted GRU input projection (both directions)
# ----------------------------------------------------------------------------
def encoder_proj_kernel(emb_ref, nmask_ref, smask_ref,
                        wc_ref, bc_ref, wih6_ref, bih6_ref,
                        gif_ref, gib_ref):
    rows = emb_ref.shape[0]            # tile_n * P  node rows
    tn = smask_ref.shape[0]            # tile_n      statement rows
    nodes = rows // tn
    C = wc_ref.shape[1]
    H3 = gif_ref.shape[1]

    # W_c linear over all node embeddings of this tile (bf16 operands, f32 acc).
    enc = jnp.dot(emb_ref[...], wc_ref[...],
                  preferred_element_type=jnp.float32) + bc_ref[...]
    enc = enc.reshape(tn, nodes, C)

    nmask = nmask_ref[...].reshape(tn, nodes, 1)
    enc = jnp.where(nmask > 0.0, enc, -1e30)           # f32 sentinel, pad nodes
    enc = jnp.max(enc, axis=1)                          # (tn, C) max over nodes
    has_node = jnp.max(nmask, axis=1)                   # (tn, 1) guard all-masked
    valid = jnp.logical_and(smask_ref[...] > 0.0, has_node > 0.0)
    enc = jnp.where(valid, enc, 0.0)                    # pad statements -> zeros

    # Hoisted GRU input-side matmul for BOTH directions (one big MXU call).
    gi = jnp.dot(enc.astype(jnp.bfloat16), wih6_ref[...],
                 preferred_element_type=jnp.float32) + bih6_ref[...]
    gif_ref[...] = gi[:, :H3]
    gib_ref[...] = gi[:, H3:]


def run_encoder_proj(emb, nmask, smask, wc_b, bc, wih6_b, bih6, hidden):
    rows, E = emb.shape
    n_stmts = smask.shape[0]
    nodes = rows // n_stmts
    C = wc_b.shape[1]
    H3 = 3 * hidden
    tile_n = _pick_stmt_tile(n_stmts)
    tile_rows = tile_n * nodes
    grid = (n_stmts // tile_n,)
    return pl.pallas_call(
        encoder_proj_kernel,
        out_shape=(jax.ShapeDtypeStruct((n_stmts, H3), jnp.float32),
                   jax.ShapeDtypeStruct((n_stmts, H3), jnp.float32)),
        grid=grid,
        in_specs=[
            pl.BlockSpec((tile_rows, E), lambda i: (i, 0)),      # emb (bf16)
            pl.BlockSpec((tile_rows, 1), lambda i: (i, 0)),      # node mask
            pl.BlockSpec((tile_n, 1), lambda i: (i, 0)),         # stmt mask
            pl.BlockSpec((E, C), lambda i: (0, 0)),              # W_c (bf16)
            pl.BlockSpec((1, C), lambda i: (0, 0)),              # b_c
            pl.BlockSpec((C, 2 * H3), lambda i: (0, 0)),         # [Wih_f|Wih_b]
            pl.BlockSpec((1, 2 * H3), lambda i: (0, 0)),         # [bih_f|bih_b]
        ],
        out_specs=(pl.BlockSpec((tile_n, H3), lambda i: (i, 0)),
                   pl.BlockSpec((tile_n, H3), lambda i: (i, 0))),
        compiler_params=pltpu.CompilerParams(
            dimension_semantics=("parallel",)),
    )(emb, nmask, smask, wc_b, bc, wih6_b, bih6)


# ----------------------------------------------------------------------------
# Kernel 2: bidirectional GRU recurrence (interleaved directions) + time max-pool
# ----------------------------------------------------------------------------
def bigru_pool_kernel(gif_ref, gib_ref,
                      whhf_ref, bhhf_ref, whhb_ref, bhhb_ref, o_ref):
    T, tb, H3 = gif_ref.shape
    H = H3 // 3
    whh_f, bhh_f = whhf_ref[...], bhhf_ref[...]
    whh_b, bhh_b = whhb_ref[...], bhhb_ref[...]

    def cell(gi, h, whh, bhh):
        # PyTorch GRU gate order (r, z, n); all gate math stays f32 (VPU/EUP).
        gh = jnp.dot(h, whh, preferred_element_type=jnp.float32) + bhh
        r = jax.nn.sigmoid(gi[:, :H] + gh[:, :H])
        z = jax.nn.sigmoid(gi[:, H:2 * H] + gh[:, H:2 * H])
        n = jnp.tanh(gi[:, 2 * H:] + r * gh[:, 2 * H:])
        return (1.0 - z) * n + z * h

    h0 = jnp.zeros((tb, H), jnp.float32)        # self.hidden is zeros
    neg = jnp.full((tb, H), -1e30, jnp.float32)

    def step(t_f, t_b, carry):
        h_f, h_b, mx_f, mx_b = carry
        h_f = cell(gif_ref[t_f], h_f, whh_f, bhh_f)     # leading-axis index
        h_b = cell(gib_ref[t_b], h_b, whh_b, bhh_b)
        return h_f, h_b, jnp.maximum(mx_f, h_f), jnp.maximum(mx_b, h_b)

    # Forward & backward chains interleaved; manual 2x unroll for scheduler
    # visibility (keeps the loop a plain fori_loop for robust lowering).
    def body(s, carry):
        t0 = 2 * s
        carry = step(t0, T - 1 - t0, carry)
        carry = step(t0 + 1, T - 2 - t0, carry)
        return carry

    carry = lax.fori_loop(0, T // 2, body, (h0, h0, neg, neg))
    if T % 2:                                   # static tail step
        carry = step(T - 1, 0, carry)
    _, _, mx_f, mx_b = carry

    # F.max_pool1d over the whole sequence == per-direction max over t.
    o_ref[...] = jnp.concatenate([mx_f, mx_b], axis=1)


def run_bigru_pool(gi_f, gi_b, gru_params):
    T, B2, H3 = gi_f.shape
    H = H3 // 3
    tile_b = _pick_batch_tile(B2)
    grid = (B2 // tile_b,)
    return pl.pallas_call(
        bigru_pool_kernel,
        out_shape=jax.ShapeDtypeStruct((B2, 2 * H), jnp.float32),
        grid=grid,
        in_specs=[
            pl.BlockSpec((T, tile_b, H3), lambda i: (0, i, 0)),
            pl.BlockSpec((T, tile_b, H3), lambda i: (0, i, 0)),
            pl.BlockSpec((H, H3), lambda i: (0, 0)),
            pl.BlockSpec((1, H3), lambda i: (0, 0)),
            pl.BlockSpec((H, H3), lambda i: (0, 0)),
            pl.BlockSpec((1, H3), lambda i: (0, 0)),
        ],
        out_specs=pl.BlockSpec((tile_b, 2 * H), lambda i: (i, 0)),
        compiler_params=pltpu.CompilerParams(
            dimension_semantics=("parallel",)),
    )(gi_f, gi_b,
      gru_params["whh_f"], gru_params["bhh_f"],
      gru_params["whh_b"], gru_params["bhh_b"])


# ----------------------------------------------------------------------------
# Kernel 3: fused hidden2label head + Gram-matrix RBF MMD loss
# ----------------------------------------------------------------------------
def head_mmd_kernel(tot_ref, tott_ref, w_ref, b_ref, y_ref, loss_ref,
                    *, kernel_mul, kernel_num):
    total = tot_ref[...]                         # (2B, D) f32, source rows first
    n = total.shape[0]
    bsz = y_ref.shape[0]                         # B

    # hidden2label head on the source half (fused epilogue, avoids extra launch).
    y_ref[...] = (jnp.dot(total[:bsz], w_ref[...],
                          preferred_element_type=jnp.float32) + b_ref[...])

    # Gram-matrix form of pairwise L2:  ||xi||^2 + ||xj||^2 - 2 * (X X^T).
    gram = jnp.dot(total, tott_ref[...], preferred_element_type=jnp.float32)
    ri = lax.broadcasted_iota(jnp.int32, (n, n), 0)
    ci = lax.broadcasted_iota(jnp.int32, (n, n), 1)
    diag = jnp.where(ri == ci, gram, 0.0)
    sq_col = jnp.sum(diag, axis=1, keepdims=True)        # (n, 1)
    sq_row = jnp.sum(diag, axis=0, keepdims=True)        # (1, n)
    l2 = jnp.maximum(sq_col + sq_row - 2.0 * gram, 0.0)

    bandwidth = jnp.sum(l2) / float(n * n - n)
    bandwidth = bandwidth / (kernel_mul ** (kernel_num // 2))
    kern = jnp.zeros_like(l2)
    for i in range(kernel_num):
        kern = kern + jnp.exp(-l2 / (bandwidth * (kernel_mul ** i)))

    # mean(XX + YY - XY - YX) == sum(sign * kern) / B^2 (equal batch sizes).
    sign = jnp.where((ri < bsz) == (ci < bsz), 1.0, -1.0)
    loss_ref[...] = (jnp.sum(sign * kern) / float(bsz * bsz)).reshape(1, 1)


def run_head_mmd(gru_out, w, b, batch, kernel_mul=2.0, kernel_num=5):
    # TODO(synk): loss could be emitted as an SMEM (1,1) output; kept in VMEM
    # for lowering robustness.
    L = w.shape[1]
    vspec = pl.BlockSpec(memory_space=pltpu.MemorySpace.VMEM)
    return pl.pallas_call(
        functools.partial(head_mmd_kernel, kernel_mul=kernel_mul,
                          kernel_num=kernel_num),
        out_shape=(jax.ShapeDtypeStruct((batch, L), jnp.float32),
                   jax.ShapeDtypeStruct((1, 1), jnp.float32)),
        in_specs=[vspec] * 4,
        out_specs=(vspec, vspec),
    )(gru_out, gru_out.T, w, b)   # transpose done once in XLA, not in-kernel


# ----------------------------------------------------------------------------
# Glue: full BatchProgramClassifier forward
# ----------------------------------------------------------------------------
def batch_program_classifier_forward(params,
                                     xs_tokens, xs_nmask, xs_smask, xs_feature, xs_labels,
                                     xt_tokens, xt_nmask, xt_smask, xt_feature, xt_labels):
    # labels are accepted (as in the PyTorch forward signature) but unused.
    del xs_labels, xt_labels
    B, T, P = xs_tokens.shape
    H = params["gru"]["whh_f"].shape[0]

    # Batch source + target into ONE encoder / GRU pass (2B rows).
    tokens = jnp.concatenate([xs_tokens, xt_tokens], axis=0)          # (2B,T,P)
    nmask = jnp.concatenate([xs_nmask, xt_nmask], axis=0).astype(jnp.float32)
    smask = jnp.concatenate([xs_smask, xt_smask], axis=0).astype(jnp.float32)
    B2 = 2 * B

    # Pad the node axis to a multiple of 8 so in-kernel reshapes are tile-aligned.
    P_pad = ((P + 7) // 8) * 8
    if P_pad != P:
        tokens = jnp.pad(tokens, ((0, 0), (0, 0), (0, P_pad - P)))
        nmask = jnp.pad(nmask, ((0, 0), (0, 0), (0, P_pad - P)))

    # Time-major flattening: statement row = t * 2B + b, so the GRU reads gi[t]
    # on the leading axis (no per-step sublane slicing).
    tok_tm = jnp.transpose(tokens, (1, 0, 2)).reshape(T * B2 * P_pad)
    nmask_tm = jnp.transpose(nmask, (1, 0, 2)).reshape(T * B2 * P_pad, 1)
    smask_tm = jnp.transpose(smask, (1, 0)).reshape(T * B2, 1)

    # bf16 embedding gather halves the dominant HBM traffic into the encoder.
    emb = jnp.take(params["embedding"], tok_tm, axis=0).astype(jnp.bfloat16)

    g = params["gru"]
    wc_b = params["wc"].astype(jnp.bfloat16)
    wih6 = jnp.concatenate([g["wih_f"], g["wih_b"]], axis=1).astype(jnp.bfloat16)
    bih6 = jnp.concatenate([g["bih_f"], g["bih_b"]], axis=1)

    gi_f, gi_b = run_encoder_proj(emb, nmask_tm, smask_tm,
                                  wc_b, params["bc"], wih6, bih6, H)
    gi_f = gi_f.reshape(T, B2, 3 * H)
    gi_b = gi_b.reshape(T, B2, 3 * H)

    pooled = run_bigru_pool(gi_f, gi_b, g)                            # (2B, 2H)

    feature = jnp.concatenate([xs_feature, xt_feature], axis=0).astype(jnp.float32)
    gru_out = jnp.concatenate([pooled, feature], axis=1)              # (2B, 2H+20)

    y, loss2d = run_head_mmd(gru_out, params["h2l_w"], params["h2l_b"], B)
    return y, loss2d[0, 0]


# ----------------------------------------------------------------------------
# Deterministic parameter construction
# ----------------------------------------------------------------------------
def init_params(key, vocab_size, embedding_dim, encode_dim, hidden_dim,
                label_size, feat_dim):
    keys = jax.random.split(key, 12)
    scale = 0.1
    return {
        "embedding": scale * jax.random.normal(keys[0], (vocab_size, embedding_dim), jnp.float32),
        "wc": scale * jax.random.normal(keys[1], (embedding_dim, encode_dim), jnp.float32),
        "bc": scale * jax.random.normal(keys[2], (1, encode_dim), jnp.float32),
        "gru": {
            "wih_f": scale * jax.random.normal(keys[3], (encode_dim, 3 * hidden_dim), jnp.float32),
            "whh_f": scale * jax.random.normal(keys[4], (hidden_dim, 3 * hidden_dim), jnp.float32),
            "bih_f": scale * jax.random.normal(keys[5], (1, 3 * hidden_dim), jnp.float32),
            "bhh_f": scale * jax.random.normal(keys[6], (1, 3 * hidden_dim), jnp.float32),
            "wih_b": scale * jax.random.normal(keys[7], (encode_dim, 3 * hidden_dim), jnp.float32),
            "whh_b": scale * jax.random.normal(keys[8], (hidden_dim, 3 * hidden_dim), jnp.float32),
            "bih_b": scale * jax.random.normal(keys[9], (1, 3 * hidden_dim), jnp.float32),
            "bhh_b": scale * jax.random.normal(keys[10], (1, 3 * hidden_dim), jnp.float32),
        },
        "h2l_w": scale * jax.random.normal(keys[11], (2 * hidden_dim + feat_dim, label_size), jnp.float32),
        "h2l_b": jnp.zeros((1, label_size), jnp.float32),
    }


if __name__ == "__main__":
    # Small shapes consistent with the module.
    B, T, P = 4, 4, 8          # batch, max_len (statements), nodes per statement
    V, E, C = 32, 16, 32       # vocab, embedding_dim, encode_dim
    H, L, F = 32, 8, 20        # hidden_dim, label_size, x_feature dim (fixed 20)

    key = jax.random.PRNGKey(0)
    kp, k1, k2, k3, k4, k5, k6 = jax.random.split(key, 7)

    params = init_params(kp, V, E, C, H, L, F)

    def make_domain(kt, km, kf, lens):
        tokens = jax.random.randint(kt, (B, T, P), 0, V - 1, dtype=jnp.int32)
        # node 0 of every statement is always a valid node; others random.
        nmask = (jax.random.uniform(km, (B, T, P)) > 0.3).astype(jnp.float32)
        nmask = nmask.at[:, :, 0].set(1.0)
        # statement-level padding at the FRONT (PyTorch pads zeros before real stmts).
        smask = jnp.zeros((B, T), jnp.float32)
        for b, ln in enumerate(lens):
            smask = smask.at[b, T - ln:].set(1.0)
        feature = jax.random.normal(kf, (B, F), jnp.float32)
        labels = jnp.zeros((B,), jnp.int32)
        return tokens, nmask, smask, feature, labels

    xs_tokens, xs_nmask, xs_smask, xs_feature, xs_labels = make_domain(k1, k2, k3, [4, 3, 4, 2])
    xt_tokens, xt_nmask, xt_smask, xt_feature, xt_labels = make_domain(k4, k5, k6, [2, 4, 3, 4])

    fwd = jax.jit(batch_program_classifier_forward)
    y, loss = fwd(params,
                  xs_tokens, xs_nmask, xs_smask, xs_feature, xs_labels,
                  xt_tokens, xt_nmask, xt_smask, xt_feature, xt_labels)
    y = jax.block_until_ready(y)
    loss = jax.block_until_ready(loss)

    assert y.shape == (B, L) and y.dtype == jnp.float32
    assert loss.shape == () and jnp.isfinite(loss)
    assert bool(jnp.all(jnp.isfinite(y)))
    print("KERNEL_OK")
</pallas_src>

<mosaic_0001>
module attributes {stable_mosaic.version = 11 : i64} {
  func.func @encoder_proj_kernel(%arg0: i32, %arg1: memref<256x16xbf16, #tpu.memory_space<vmem>>, %arg2: memref<256x1xf32, #tpu.memory_space<vmem>>, %arg3: memref<32x1xf32, #tpu.memory_space<vmem>>, %arg4: memref<16x32xbf16, #tpu.memory_space<vmem>>, %arg5: memref<1x32xf32, #tpu.memory_space<vmem>>, %arg6: memref<32x192xbf16, #tpu.memory_space<vmem>>, %arg7: memref<1x192xf32, #tpu.memory_space<vmem>>, %arg8: memref<32x96xf32, #tpu.memory_space<vmem>>, %arg9: memref<32x96xf32, #tpu.memory_space<vmem>>) attributes {dimension_semantics = [#tpu.dimension_semantics<parallel>], iteration_bounds = array<i64: 1>, scalar_prefetch = 0 : i64, scratch_operands = 0 : i64, tpu.core_type = #tpu.core_type<tc>, window_params = [{transform_indices = @transform_0, window_bounds = array<i64: 256, 16>}, {transform_indices = @transform_1, window_bounds = array<i64: 256, 1>}, {transform_indices = @transform_2, window_bounds = array<i64: 32, 1>}, {pipeline_mode = #tpu.pipeline_mode<synchronous>, transform_indices = @transform_3, window_bounds = array<i64: 16, 32>}, {pipeline_mode = #tpu.pipeline_mode<synchronous>, transform_indices = @transform_4, window_bounds = array<i64: 1, 32>}, {pipeline_mode = #tpu.pipeline_mode<synchronous>, transform_indices = @transform_5, window_bounds = array<i64: 32, 192>}, {pipeline_mode = #tpu.pipeline_mode<synchronous>, transform_indices = @transform_6, window_bounds = array<i64: 1, 192>}, {transform_indices = @transform_7, window_bounds = array<i64: 32, 96>}, {transform_indices = @transform_8, window_bounds = array<i64: 32, 96>}]} {
    %c0 = arith.constant 0 : index
    %c0_0 = arith.constant 0 : index
    %0 = vector.load %arg1[%c0, %c0_0] : memref<256x16xbf16, #tpu.memory_space<vmem>>, vector<256x16xbf16>
    %c0_1 = arith.constant 0 : index
    %c0_2 = arith.constant 0 : index
    %1 = vector.load %arg4[%c0_1, %c0_2] : memref<16x32xbf16, #tpu.memory_space<vmem>>, vector<16x32xbf16>
    %cst = arith.constant dense<0.000000e+00> : vector<256x32xf32>
    %2 = tpu.matmul %0, %1, %cst {dimension_numbers = #tpu.dot_dimension_numbers<[1], [0], [0], [1], [0, 0, 1, 1], [], []>} : vector<256x16xbf16>, vector<16x32xbf16>, vector<256x32xf32> -> vector<256x32xf32>
    %c0_3 = arith.constant 0 : index
    %c0_4 = arith.constant 0 : index
    %3 = vector.load %arg5[%c0_3, %c0_4] : memref<1x32xf32, #tpu.memory_space<vmem>>, vector<1x32xf32>
    %4 = vector.broadcast %3 : vector<1x32xf32> to vector<256x32xf32>
    %5 = arith.addf %2, %4 : vector<256x32xf32>
    %6 = vector.shape_cast %5 : vector<256x32xf32> to vector<32x8x32xf32>
    %c0_5 = arith.constant 0 : index
    %c0_6 = arith.constant 0 : index
    %7 = vector.load %arg2[%c0_5, %c0_6] : memref<256x1xf32, #tpu.memory_space<vmem>>, vector<256x1xf32>
    %8 = vector.shape_cast %7 : vector<256x1xf32> to vector<32x8x1xf32>
    %cst_7 = arith.constant 0.000000e+00 : f32
    %9 = vector.broadcast %cst_7 : f32 to vector<32x8x1xf32>
    %10 = arith.cmpf ogt, %8, %9 : vector<32x8x1xf32>
    %cst_8 = arith.constant -1.000000e+30 : f32
    %11 = vector.shape_cast %10 : vector<32x8x1xi1> to vector<32x8x1xi1>
    %12 = vector.broadcast %11 : vector<32x8x1xi1> to vector<32x8x32xi1>
    %13 = vector.broadcast %cst_8 : f32 to vector<32x8x32xf32>
    %14 = arith.select %12, %6, %13 : vector<32x8x32xi1>, vector<32x8x32xf32>
    %cst_9 = arith.constant dense<0xFF800000> : vector<32x32xf32>
    %15 = vector.multi_reduction <maximumf>, %14, %cst_9 [1] : vector<32x8x32xf32> to vector<32x32xf32>
    %cst_10 = arith.constant dense<0xFF800000> : vector<32x1xf32>
    %16 = vector.multi_reduction <maximumf>, %8, %cst_10 [1] : vector<32x8x1xf32> to vector<32x1xf32>
    %c0_11 = arith.constant 0 : index
    %c0_12 = arith.constant 0 : index
    %17 = vector.load %arg3[%c0_11, %c0_12] : memref<32x1xf32, #tpu.memory_space<vmem>>, vector<32x1xf32>
    %cst_13 = arith.constant 0.000000e+00 : f32
    %18 = vector.broadcast %cst_13 : f32 to vector<32x1xf32>
    %19 = arith.cmpf ogt, %17, %18 : vector<32x1xf32>
    %cst_14 = arith.constant 0.000000e+00 : f32
    %20 = vector.broadcast %cst_14 : f32 to vector<32x1xf32>
    %21 = arith.cmpf ogt, %16, %20 : vector<32x1xf32>
    %22 = arith.andi %19, %21 : vector<32x1xi1>
    %cst_15 = arith.constant 0.000000e+00 : f32
    %23 = vector.shape_cast %22 : vector<32x1xi1> to vector<32x1xi1>
    %24 = vector.broadcast %23 : vector<32x1xi1> to vector<32x32xi1>
    %25 = vector.broadcast %cst_15 : f32 to vector<32x32xf32>
    %26 = arith.select %24, %15, %25 : vector<32x32xi1>, vector<32x32xf32>
    %27 = arith.truncf %26 : vector<32x32xf32> to vector<32x32xbf16>
    %c0_16 = arith.constant 0 : index
    %c0_17 = arith.constant 0 : index
    %28 = vector.load %arg6[%c0_16, %c0_17] : memref<32x192xbf16, #tpu.memory_space<vmem>>, vector<32x192xbf16>
    %cst_18 = arith.constant dense<0.000000e+00> : vector<32x192xf32>
    %29 = tpu.matmul %27, %28, %cst_18 {dimension_numbers = #tpu.dot_dimension_numbers<[1], [0], [0], [1], [0, 0, 1, 1], [], []>} : vector<32x32xbf16>, vector<32x192xbf16>, vector<32x192xf32> -> vector<32x192xf32>
    %c0_19 = arith.constant 0 : index
    %c0_20 = arith.constant 0 : index
    %30 = vector.load %arg7[%c0_19, %c0_20] : memref<1x192xf32, #tpu.memory_space<vmem>>, vector<1x192xf32>
    %31 = vector.broadcast %30 : vector<1x192xf32> to vector<32x192xf32>
    %32 = arith.addf %29, %31 : vector<32x192xf32>
    %33 = vector.extract_strided_slice %32 {offsets = [0, 0], sizes = [32, 96], strides = [1, 1]} : vector<32x192xf32> to vector<32x96xf32>
    %c0_21 = arith.constant 0 : index
    %c0_22 = arith.constant 0 : index
    %34 = vector.load %arg8[%c0_21, %c0_22] : memref<32x96xf32, #tpu.memory_space<vmem>>, vector<32x96xf32>
    tpu.vector_store %arg8[%c0_21, %c0_22], %33 {strides = array<i32>} : memref<32x96xf32, #tpu.memory_space<vmem>>, vector<32x96xf32>,
    %35 = vector.extract_strided_slice %32 {offsets = [0, 96], sizes = [32, 96], strides = [1, 1]} : vector<32x192xf32> to vector<32x96xf32>
    %c0_23 = arith.constant 0 : index
    %c0_24 = arith.constant 0 : index
    %36 = vector.load %arg9[%c0_23, %c0_24] : memref<32x96xf32, #tpu.memory_space<vmem>>, vector<32x96xf32>
    tpu.vector_store %arg9[%c0_23, %c0_24], %35 {strides = array<i32>} : memref<32x96xf32, #tpu.memory_space<vmem>>, vector<32x96xf32>,
    return
  }
  func.func @transform_0(%arg0: i32) -> (i32, i32) {
    %c0_i32 = arith.constant 0 : i32
    %c0_i32_0 = arith.constant 0 : i32
    return %arg0, %c0_i32 : i32, i32
  }
  func.func @transform_1(%arg0: i32) -> (i32, i32) {
    %c0_i32 = arith.constant 0 : i32
    %c0_i32_0 = arith.constant 0 : i32
    return %arg0, %c0_i32 : i32, i32
  }
  func.func @transform_2(%arg0: i32) -> (i32, i32) {
    %c0_i32 = arith.constant 0 : i32
    %c0_i32_0 = arith.constant 0 : i32
    return %arg0, %c0_i32 : i32, i32
  }
  func.func @transform_3(%arg0: i32) -> (i32, i32) {
    %c0_i32 = arith.constant 0 : i32
    %c0_i32_0 = arith.constant 0 : i32
    %c0_i32_1 = arith.constant 0 : i32
    return %c0_i32, %c0_i32_0 : i32, i32
  }
  func.func @transform_4(%arg0: i32) -> (i32, i32) {
    %c0_i32 = arith.constant 0 : i32
    %c0_i32_0 = arith.constant 0 : i32
    %c0_i32_1 = arith.constant 0 : i32
    return %c0_i32, %c0_i32_0 : i32, i32
  }
  func.func @transform_5(%arg0: i32) -> (i32, i32) {
    %c0_i32 = arith.constant 0 : i32
    %c0_i32_0 = arith.constant 0 : i32
    %c0_i32_1 = arith.constant 0 : i32
    return %c0_i32, %c0_i32_0 : i32, i32
  }
  func.func @transform_6(%arg0: i32) -> (i32, i32) {
    %c0_i32 = arith.constant 0 : i32
    %c0_i32_0 = arith.constant 0 : i32
    %c0_i32_1 = arith.constant 0 : i32
    return %c0_i32, %c0_i32_0 : i32, i32
  }
  func.func @transform_7(%arg0: i32) -> (i32, i32) {
    %c0_i32 = arith.constant 0 : i32
    %c0_i32_0 = arith.constant 0 : i32
    return %arg0, %c0_i32 : i32, i32
  }
  func.func @transform_8(%arg0: i32) -> (i32, i32) {
    %c0_i32 = arith.constant 0 : i32
    %c0_i32_0 = arith.constant 0 : i32
    return %arg0, %c0_i32 : i32, i32
  }
}

module attributes {stable_mosaic.version = 11 : i64} {
  func.func @bigru_pool_kernel(%arg0: i32, %arg1: memref<4x8x96xf32, #tpu.memory_space<vmem>>, %arg2: memref<4x8x96xf32, #tpu.memory_space<vmem>>, %arg3: memref<32x96xf32, #tpu.memory_space<vmem>>, %arg4: memref<1x96xf32, #tpu.memory_space<vmem>>, %arg5: memref<32x96xf32, #tpu.memory_space<vmem>>, %arg6: memref<1x96xf32, #tpu.memory_space<vmem>>, %arg7: memref<8x64xf32, #tpu.memory_space<vmem>>) attributes {dimension_semantics = [#tpu.dimension_semantics<parallel>], iteration_bounds = array<i64: 1>, scalar_prefetch = 0 : i64, scratch_operands = 0 : i64, tpu.core_type = #tpu.core_type<tc>, window_params = [{transform_indices = @transform_0, window_bounds = array<i64: 4, 8, 96>}, {transform_indices = @transform_1, window_bounds = array<i64: 4, 8, 96>}, {pipeline_mode = #tpu.pipeline_mode<synchronous>, transform_indices = @transform_2, window_bounds = array<i64: 32, 96>}, {pipeline_mode = #tpu.pipeline_mode<synchronous>, transform_indices = @transform_3, window_bounds = array<i64: 1, 96>}, {pipeline_mode = #tpu.pipeline_mode<synchronous>, transform_indices = @transform_4, window_bounds = array<i64: 32, 96>}, {pipeline_mode = #tpu.pipeline_mode<synchronous>, transform_indices = @transform_5, window_bounds = array<i64: 1, 96>}, {transform_indices = @transform_6, window_bounds = array<i64: 8, 64>}]} {
    %c0 = arith.constant 0 : index
    %c0_0 = arith.constant 0 : index
    %0 = vector.load %arg3[%c0, %c0_0] : memref<32x96xf32, #tpu.memory_space<vmem>>, vector<32x96xf32>
    %c0_1 = arith.constant 0 : index
    %c0_2 = arith.constant 0 : index
    %1 = vector.load %arg4[%c0_1, %c0_2] : memref<1x96xf32, #tpu.memory_space<vmem>>, vector<1x96xf32>
    %c0_3 = arith.constant 0 : index
    %c0_4 = arith.constant 0 : index
    %2 = vector.load %arg5[%c0_3, %c0_4] : memref<32x96xf32, #tpu.memory_space<vmem>>, vector<32x96xf32>
    %c0_5 = arith.constant 0 : index
    %c0_6 = arith.constant 0 : index
    %3 = vector.load %arg6[%c0_5, %c0_6] : memref<1x96xf32, #tpu.memory_space<vmem>>, vector<1x96xf32>
    %cst = arith.constant 0.000000e+00 : f32
    %4 = vector.broadcast %cst : f32 to vector<8x32xf32>
    %cst_7 = arith.constant -1.000000e+30 : f32
    %5 = vector.broadcast %cst_7 : f32 to vector<8x32xf32>
    %c0_i32 = arith.constant 0 : i32
    %c2_i32 = arith.constant 2 : i32
    %6 = arith.addi %c0_i32, %c2_i32 : i32
    %c1_i32 = arith.constant 1 : i32
    %7:4 = scf.for %arg8 = %c0_i32 to %6 step %c1_i32 iter_args(%arg9 = %4, %arg10 = %4, %arg11 = %5, %arg12 = %5) -> (vector<8x32xf32>, vector<8x32xf32>, vector<8x32xf32>, vector<8x32xf32>)  : i32 {
      %c2_i32_11 = arith.constant 2 : i32
      %10 = arith.muli %c2_i32_11, %arg8 : i32
      %c3_i32 = arith.constant 3 : i32
      %11 = arith.subi %c3_i32, %10 : i32
      %12 = arith.index_cast %10 : i32 to index
      %c0_12 = arith.constant 0 : index
      %c0_13 = arith.constant 0 : index
      %13 = vector.load %arg1[%12, %c0_12, %c0_13] : memref<4x8x96xf32, #tpu.memory_space<vmem>>, vector<1x8x96xf32>
      %14 = vector.shape_cast %13 : vector<1x8x96xf32> to vector<8x96xf32>
      %cst_14 = arith.constant dense<0.000000e+00> : vector<8x96xf32>
      %15 = tpu.matmul %arg9, %0, %cst_14 {dimension_numbers = #tpu.dot_dimension_numbers<[1], [0], [0], [1], [0, 0, 1, 1], [], []>} : vector<8x32xf32>, vector<32x96xf32>, vector<8x96xf32> -> vector<8x96xf32>
      %16 = vector.broadcast %1 : vector<1x96xf32> to vector<8x96xf32>
      %17 = arith.addf %15, %16 : vector<8x96xf32>
      %18 = vector.extract_strided_slice %14 {offsets = [0, 0], sizes = [8, 32], strides = [1, 1]} : vector<8x96xf32> to vector<8x32xf32>
      %19 = vector.extract_strided_slice %17 {offsets = [0, 0], sizes = [8, 32], strides = [1, 1]} : vector<8x96xf32> to vector<8x32xf32>
      %20 = arith.addf %18, %19 : vector<8x32xf32>
      %21 = arith.negf %20 : vector<8x32xf32>
      %22 = math.exp %21 : vector<8x32xf32>
      %cst_15 = arith.constant 1.000000e+00 : f32
      %23 = vector.broadcast %cst_15 : f32 to vector<8x32xf32>
      %24 = arith.addf %23, %22 : vector<8x32xf32>
      %25 = arith.divf %23, %24 : vector<8x32xf32>
      %26 = vector.extract_strided_slice %14 {offsets = [0, 32], sizes = [8, 32], strides = [1, 1]} : vector<8x96xf32> to vector<8x32xf32>
      %27 = vector.extract_strided_slice %17 {offsets = [0, 32], sizes = [8, 32], strides = [1, 1]} : vector<8x96xf32> to vector<8x32xf32>
      %28 = arith.addf %26, %27 : vector<8x32xf32>
      %29 = arith.negf %28 : vector<8x32xf32>
      %30 = math.exp %29 : vector<8x32xf32>
      %cst_16 = arith.constant 1.000000e+00 : f32
      %31 = vector.broadcast %cst_16 : f32 to vector<8x32xf32>
      %32 = arith.addf %31, %30 : vector<8x32xf32>
      %33 = arith.divf %31, %32 : vector<8x32xf32>
      %34 = vector.extract_strided_slice %14 {offsets = [0, 64], sizes = [8, 32], strides = [1, 1]} : vector<8x96xf32> to vector<8x32xf32>
      %35 = vector.extract_strided_slice %17 {offsets = [0, 64], sizes = [8, 32], strides = [1, 1]} : vector<8x96xf32> to vector<8x32xf32>
      %36 = arith.mulf %25, %35 : vector<8x32xf32>
      %37 = arith.addf %34, %36 : vector<8x32xf32>
      %38 = math.tanh %37 : vector<8x32xf32>
      %cst_17 = arith.constant 1.000000e+00 : f32
      %39 = vector.broadcast %cst_17 : f32 to vector<8x32xf32>
      %40 = arith.subf %39, %33 : vector<8x32xf32>
      %41 = arith.mulf %40, %38 : vector<8x32xf32>
      %42 = arith.mulf %33, %arg9 : vector<8x32xf32>
      %43 = arith.addf %41, %42 : vector<8x32xf32>
      %44 = arith.index_cast %11 : i32 to index
      %c0_18 = arith.constant 0 : index
      %c0_19 = arith.constant 0 : index
      %45 = vector.load %arg2[%44, %c0_18, %c0_19] : memref<4x8x96xf32, #tpu.memory_space<vmem>>, vector<1x8x96xf32>
      %46 = vector.shape_cast %45 : vector<1x8x96xf32> to vector<8x96xf32>
      %cst_20 = arith.constant dense<0.000000e+00> : vector<8x96xf32>
      %47 = tpu.matmul %arg10, %2, %cst_20 {dimension_numbers = #tpu.dot_dimension_numbers<[1], [0], [0], [1], [0, 0, 1, 1], [], []>} : vector<8x32xf32>, vector<32x96xf32>, vector<8x96xf32> -> vector<8x96xf32>
      %48 = vector.broadcast %3 : vector<1x96xf32> to vector<8x96xf32>
      %49 = arith.addf %47, %48 : vector<8x96xf32>
      %50 = vector.extract_strided_slice %46 {offsets = [0, 0], sizes = [8, 32], strides = [1, 1]} : vector<8x96xf32> to vector<8x32xf32>
      %51 = vector.extract_strided_slice %49 {offsets = [0, 0], sizes = [8, 32], strides = [1, 1]} : vector<8x96xf32> to vector<8x32xf32>
      %52 = arith.addf %50, %51 : vector<8x32xf32>
      %53 = arith.negf %52 : vector<8x32xf32>
      %54 = math.exp %53 : vector<8x32xf32>
      %cst_21 = arith.constant 1.000000e+00 : f32
      %55 = vector.broadcast %cst_21 : f32 to vector<8x32xf32>
      %56 = arith.addf %55, %54 : vector<8x32xf32>
      %57 = arith.divf %55, %56 : vector<8x32xf32>
      %58 = vector.extract_strided_slice %46 {offsets = [0, 32], sizes = [8, 32], strides = [1, 1]} : vector<8x96xf32> to vector<8x32xf32>
      %59 = vector.extract_strided_slice %49 {offsets = [0, 32], sizes = [8, 32], strides = [1, 1]} : vector<8x96xf32> to vector<8x32xf32>
      %60 = arith.addf %58, %59 : vector<8x32xf32>
      %61 = arith.negf %60 : vector<8x32xf32>
      %62 = math.exp %61 : vector<8x32xf32>
      %cst_22 = arith.constant 1.000000e+00 : f32
      %63 = vector.broadcast %cst_22 : f32 to vector<8x32xf32>
      %64 = arith.addf %63, %62 : vector<8x32xf32>
      %65 = arith.divf %63, %64 : vector<8x32xf32>
      %66 = vector.extract_strided_slice %46 {offsets = [0, 64], sizes = [8, 32], strides = [1, 1]} : vector<8x96xf32> to vector<8x32xf32>
      %67 = vector.extract_strided_slice %49 {offsets = [0, 64], sizes = [8, 32], strides = [1, 1]} : vector<8x96xf32> to vector<8x32xf32>
      %68 = arith.mulf %57, %67 : vector<8x32xf32>
      %69 = arith.addf %66, %68 : vector<8x32xf32>
      %70 = math.tanh %69 : vector<8x32xf32>
      %cst_23 = arith.constant 1.000000e+00 : f32
      %71 = vector.broadcast %cst_23 : f32 to vector<8x32xf32>
      %72 = arith.subf %71, %65 : vector<8x32xf32>
      %73 = arith.mulf %72, %70 : vector<8x32xf32>
      %74 = arith.mulf %65, %arg10 : vector<8x32xf32>
      %75 = arith.addf %73, %74 : vector<8x32xf32>
      %76 = arith.maximumf %arg11, %43 : vector<8x32xf32>
      %77 = arith.maximumf %arg12, %75 : vector<8x32xf32>
      %c1_i32_24 = arith.constant 1 : i32
      %78 = arith.addi %10, %c1_i32_24 : i32
      %c2_i32_25 = arith.constant 2 : i32
      %79 = arith.subi %c2_i32_25, %10 : i32
      %80 = arith.index_cast %78 : i32 to index
      %c0_26 = arith.constant 0 : index
      %c0_27 = arith.constant 0 : index
      %81 = vector.load %arg1[%80, %c0_26, %c0_27] : memref<4x8x96xf32, #tpu.memory_space<vmem>>, vector<1x8x96xf32>
      %82 = vector.shape_cast %81 : vector<1x8x96xf32> to vector<8x96xf32>
      %cst_28 = arith.constant dense<0.000000e+00> : vector<8x96xf32>
      %83 = tpu.matmul %43, %0, %cst_28 {dimension_numbers = #tpu.dot_dimension_numbers<[1], [0], [0], [1], [0, 0, 1, 1], [], []>} : vector<8x32xf32>, vector<32x96xf32>, vector<8x96xf32> -> vector<8x96xf32>
      %84 = vector.broadcast %1 : vector<1x96xf32> to vector<8x96xf32>
      %85 = arith.addf %83, %84 : vector<8x96xf32>
      %86 = vector.extract_strided_slice %82 {offsets = [0, 0], sizes = [8, 32], strides = [1, 1]} : vector<8x96xf32> to vector<8x32xf32>
      %87 = vector.extract_strided_slice %85 {offsets = [0, 0], sizes = [8, 32], strides = [1, 1]} : vector<8x96xf32> to vector<8x32xf32>
      %88 = arith.addf %86, %87 : vector<8x32xf32>
      %89 = arith.negf %88 : vector<8x32xf32>
      %90 = math.exp %89 : vector<8x32xf32>
      %cst_29 = arith.constant 1.000000e+00 : f32
      %91 = vector.broadcast %cst_29 : f32 to vector<8x32xf32>
      %92 = arith.addf %91, %90 : vector<8x32xf32>
      %93 = arith.divf %91, %92 : vector<8x32xf32>
      %94 = vector.extract_strided_slice %82 {offsets = [0, 32], sizes = [8, 32], strides = [1, 1]} : vector<8x96xf32> to vector<8x32xf32>
      %95 = vector.extract_strided_slice %85 {offsets = [0, 32], sizes = [8, 32], strides = [1, 1]} : vector<8x96xf32> to vector<8x32xf32>
      %96 = arith.addf %94, %95 : vector<8x32xf32>
      %97 = arith.negf %96 : vector<8x32xf32>
      %98 = math.exp %97 : vector<8x32xf32>
      %cst_30 = arith.constant 1.000000e+00 : f32
      %99 = vector.broadcast %cst_30 : f32 to vector<8x32xf32>
      %100 = arith.addf %99, %98 : vector<8x32xf32>
      %101 = arith.divf %99, %100 : vector<8x32xf32>
      %102 = vector.extract_strided_slice %82 {offsets = [0, 64], sizes = [8, 32], strides = [1, 1]} : vector<8x96xf32> to vector<8x32xf32>
      %103 = vector.extract_strided_slice %85 {offsets = [0, 64], sizes = [8, 32], strides = [1, 1]} : vector<8x96xf32> to vector<8x32xf32>
      %104 = arith.mulf %93, %103 : vector<8x32xf32>
      %105 = arith.addf %102, %104 : vector<8x32xf32>
      %106 = math.tanh %105 : vector<8x32xf32>
      %cst_31 = arith.constant 1.000000e+00 : f32
      %107 = vector.broadcast %cst_31 : f32 to vector<8x32xf32>
      %108 = arith.subf %107, %101 : vector<8x32xf32>
      %109 = arith.mulf %108, %106 : vector<8x32xf32>
      %110 = arith.mulf %101, %43 : vector<8x32xf32>
      %111 = arith.addf %109, %110 : vector<8x32xf32>
      %112 = arith.index_cast %79 : i32 to index
      %c0_32 = arith.constant 0 : index
      %c0_33 = arith.constant 0 : index
      %113 = vector.load %arg2[%112, %c0_32, %c0_33] : memref<4x8x96xf32, #tpu.memory_space<vmem>>, vector<1x8x96xf32>
      %114 = vector.shape_cast %113 : vector<1x8x96xf32> to vector<8x96xf32>
      %cst_34 = arith.constant dense<0.000000e+00> : vector<8x96xf32>
      %115 = tpu.matmul %75, %2, %cst_34 {dimension_numbers = #tpu.dot_dimension_numbers<[1], [0], [0], [1], [0, 0, 1, 1], [], []>} : vector<8x32xf32>, vector<32x96xf32>, vector<8x96xf32> -> vector<8x96xf32>
      %116 = vector.broadcast %3 : vector<1x96xf32> to vector<8x96xf32>
      %117 = arith.addf %115, %116 : vector<8x96xf32>
      %118 = vector.extract_strided_slice %114 {offsets = [0, 0], sizes = [8, 32], strides = [1, 1]} : vector<8x96xf32> to vector<8x32xf32>
      %119 = vector.extract_strided_slice %117 {offsets = [0, 0], sizes = [8, 32], strides = [1, 1]} : vector<8x96xf32> to vector<8x32xf32>
      %120 = arith.addf %118, %119 : vector<8x32xf32>
      %121 = arith.negf %120 : vector<8x32xf32>
      %122 = math.exp %121 : vector<8x32xf32>
      %cst_35 = arith.constant 1.000000e+00 : f32
      %123 = vector.broadcast %cst_35 : f32 to vector<8x32xf32>
      %124 = arith.addf %123, %122 : vector<8x32xf32>
      %125 = arith.divf %123, %124 : vector<8x32xf32>
      %126 = vector.extract_strided_slice %114 {offsets = [0, 32], sizes = [8, 32], strides = [1, 1]} : vector<8x96xf32> to vector<8x32xf32>
      %127 = vector.extract_strided_slice %117 {offsets = [0, 32], sizes = [8, 32], strides = [1, 1]} : vector<8x96xf32> to vector<8x32xf32>
      %128 = arith.addf %126, %127 : vector<8x32xf32>
      %129 = arith.negf %128 : vector<8x32xf32>
      %130 = math.exp %129 : vector<8x32xf32>
      %cst_36 = arith.constant 1.000000e+00 : f32
      %131 = vector.broadcast %cst_36 : f32 to vector<8x32xf32>
      %132 = arith.addf %131, %130 : vector<8x32xf32>
      %133 = arith.divf %131, %132 : vector<8x32xf32>
      %134 = vector.extract_strided_slice %114 {offsets = [0, 64], sizes = [8, 32], strides = [1, 1]} : vector<8x96xf32> to vector<8x32xf32>
      %135 = vector.extract_strided_slice %117 {offsets = [0, 64], sizes = [8, 32], strides = [1, 1]} : vector<8x96xf32> to vector<8x32xf32>
      %136 = arith.mulf %125, %135 : vector<8x32xf32>
      %137 = arith.addf %134, %136 : vector<8x32xf32>
      %138 = math.tanh %137 : vector<8x32xf32>
      %cst_37 = arith.constant 1.000000e+00 : f32
      %139 = vector.broadcast %cst_37 : f32 to vector<8x32xf32>
      %140 = arith.subf %139, %133 : vector<8x32xf32>
      %141 = arith.mulf %140, %138 : vector<8x32xf32>
      %142 = arith.mulf %133, %75 : vector<8x32xf32>
      %143 = arith.addf %141, %142 : vector<8x32xf32>
      %144 = arith.maximumf %76, %111 : vector<8x32xf32>
      %145 = arith.maximumf %77, %143 : vector<8x32xf32>
      scf.yield %111, %143, %144, %145 : vector<8x32xf32>, vector<8x32xf32>, vector<8x32xf32>, vector<8x32xf32>
    }
    %c2_i32_8 = arith.constant 2 : i32
    %8 = tpu.concatenate %7#2, %7#3 in 1 : vector<8x32xf32>, vector<8x32xf32> -> vector<8x64xf32>
    %c0_9 = arith.constant 0 : index
    %c0_10 = arith.constant 0 : index
    %9 = vector.load %arg7[%c0_9, %c0_10] : memref<8x64xf32, #tpu.memory_space<vmem>>, vector<8x64xf32>
    tpu.vector_store %arg7[%c0_9, %c0_10], %8 {strides = array<i32>} : memref<8x64xf32, #tpu.memory_space<vmem>>, vector<8x64xf32>,
    return
  }
  func.func @transform_0(%arg0: i32) -> (i32, i32, i32) {
    %c0_i32 = arith.constant 0 : i32
    %c0_i32_0 = arith.constant 0 : i32
    %c0_i32_1 = arith.constant 0 : i32
    return %c0_i32, %arg0, %c0_i32_0 : i32, i32, i32
  }
  func.func @transform_1(%arg0: i32) -> (i32, i32, i32) {
    %c0_i32 = arith.constant 0 : i32
    %c0_i32_0 = arith.constant 0 : i32
    %c0_i32_1 = arith.constant 0 : i32
    return %c0_i32, %arg0, %c0_i32_0 : i32, i32, i32
  }
  func.func @transform_2(%arg0: i32) -> (i32, i32) {
    %c0_i32 = arith.constant 0 : i32
    %c0_i32_0 = arith.constant 0 : i32
    %c0_i32_1 = arith.constant 0 : i32
    return %c0_i32, %c0_i32_0 : i32, i32
  }
  func.func @transform_3(%arg0: i32) -> (i32, i32) {
    %c0_i32 = arith.constant 0 : i32
    %c0_i32_0 = arith.constant 0 : i32
    %c0_i32_1 = arith.constant 0 : i32
    return %c0_i32, %c0_i32_0 : i32, i32
  }
  func.func @transform_4(%arg0: i32) -> (i32, i32) {
    %c0_i32 = arith.constant 0 : i32
    %c0_i32_0 = arith.constant 0 : i32
    %c0_i32_1 = arith.constant 0 : i32
    return %c0_i32, %c0_i32_0 : i32, i32
  }
  func.func @transform_5(%arg0: i32) -> (i32, i32) {
    %c0_i32 = arith.constant 0 : i32
    %c0_i32_0 = arith.constant 0 : i32
    %c0_i32_1 = arith.constant 0 : i32
    return %c0_i32, %c0_i32_0 : i32, i32
  }
  func.func @transform_6(%arg0: i32) -> (i32, i32) {
    %c0_i32 = arith.constant 0 : i32
    %c0_i32_0 = arith.constant 0 : i32
    return %arg0, %c0_i32 : i32, i32
  }
}

module attributes {stable_mosaic.version = 11 : i64} {
  func.func @head_mmd_kernel(%arg0: memref<8x84xf32, #tpu.memory_space<vmem>>, %arg1: memref<84x8xf32, #tpu.memory_space<vmem>>, %arg2: memref<84x8xf32, #tpu.memory_space<vmem>>, %arg3: memref<1x8xf32, #tpu.memory_space<vmem>>, %arg4: memref<4x8xf32, #tpu.memory_space<vmem>>, %arg5: memref<1x1xf32, #tpu.memory_space<vmem>>) attributes {dimension_semantics = [], scalar_prefetch = 0 : i64, scratch_operands = 0 : i64, tpu.core_type = #tpu.core_type<tc>} {
    %c0 = arith.constant 0 : index
    %c0_0 = arith.constant 0 : index
    %0 = vector.load %arg0[%c0, %c0_0] : memref<8x84xf32, #tpu.memory_space<vmem>>, vector<8x84xf32>
    %1 = vector.extract_strided_slice %0 {offsets = [0, 0], sizes = [4, 84], strides = [1, 1]} : vector<8x84xf32> to vector<4x84xf32>
    %c0_1 = arith.constant 0 : index
    %c0_2 = arith.constant 0 : index
    %2 = vector.load %arg2[%c0_1, %c0_2] : memref<84x8xf32, #tpu.memory_space<vmem>>, vector<84x8xf32>
    %cst = arith.constant dense<0.000000e+00> : vector<4x8xf32>
    %3 = tpu.matmul %1, %2, %cst {dimension_numbers = #tpu.dot_dimension_numbers<[1], [0], [0], [1], [0, 0, 1, 1], [], []>} : vector<4x84xf32>, vector<84x8xf32>, vector<4x8xf32> -> vector<4x8xf32>
    %c0_3 = arith.constant 0 : index
    %c0_4 = arith.constant 0 : index
    %4 = vector.load %arg3[%c0_3, %c0_4] : memref<1x8xf32, #tpu.memory_space<vmem>>, vector<1x8xf32>
    %5 = vector.broadcast %4 : vector<1x8xf32> to vector<4x8xf32>
    %6 = arith.addf %3, %5 : vector<4x8xf32>
    %c0_5 = arith.constant 0 : index
    %c0_6 = arith.constant 0 : index
    %7 = vector.load %arg4[%c0_5, %c0_6] : memref<4x8xf32, #tpu.memory_space<vmem>>, vector<4x8xf32>
    tpu.vector_store %arg4[%c0_5, %c0_6], %6 {strides = array<i32>} : memref<4x8xf32, #tpu.memory_space<vmem>>, vector<4x8xf32>,
    %c0_7 = arith.constant 0 : index
    %c0_8 = arith.constant 0 : index
    %8 = vector.load %arg1[%c0_7, %c0_8] : memref<84x8xf32, #tpu.memory_space<vmem>>, vector<84x8xf32>
    %cst_9 = arith.constant dense<0.000000e+00> : vector<8x8xf32>
    %9 = tpu.matmul %0, %8, %cst_9 {dimension_numbers = #tpu.dot_dimension_numbers<[1], [0], [0], [1], [0, 0, 1, 1], [], []>} : vector<8x84xf32>, vector<84x8xf32>, vector<8x8xf32> -> vector<8x8xf32>
    %10 = tpu.iota {dimensions = array<i32: 0>} : vector<8x8xi32>
    %11 = tpu.iota {dimensions = array<i32: 1>} : vector<8x8xi32>
    %12 = arith.cmpi eq, %10, %11 : vector<8x8xi32>
    %cst_10 = arith.constant 0.000000e+00 : f32
    %13 = vector.broadcast %cst_10 : f32 to vector<8x8xf32>
    %14 = arith.select %12, %9, %13 : vector<8x8xi1>, vector<8x8xf32>
    %cst_11 = arith.constant dense<0.000000e+00> : vector<8xf32>
    %15 = vector.multi_reduction <add>, %14, %cst_11 [1] : vector<8x8xf32> to vector<8xf32>
    %16 = vector.shape_cast %15 : vector<8xf32> to vector<8x1xf32>
    %cst_12 = arith.constant dense<0.000000e+00> : vector<8xf32>
    %17 = vector.multi_reduction <add>, %14, %cst_12 [0] : vector<8x8xf32> to vector<8xf32>
    %18 = vector.shape_cast %17 : vector<8xf32> to vector<1x8xf32>
    %19 = vector.broadcast %16 : vector<8x1xf32> to vector<8x8xf32>
    %20 = vector.broadcast %18 : vector<1x8xf32> to vector<8x8xf32>
    %21 = arith.addf %19, %20 : vector<8x8xf32>
    %cst_13 = arith.constant 2.000000e+00 : f32
    %22 = vector.broadcast %cst_13 : f32 to vector<8x8xf32>
    %23 = arith.mulf %22, %9 : vector<8x8xf32>
    %24 = arith.subf %21, %23 : vector<8x8xf32>
    %cst_14 = arith.constant 0.000000e+00 : f32
    %25 = vector.broadcast %cst_14 : f32 to vector<8x8xf32>
    %26 = arith.maximumf %24, %25 : vector<8x8xf32>
    %27 = vector.shape_cast %26 : vector<8x8xf32> to vector<1x8x8xf32>
    %cst_15 = arith.constant dense<0.000000e+00> : vector<1xf32>
    %28 = vector.multi_reduction <add>, %27, %cst_15 [1, 2] : vector<1x8x8xf32> to vector<1xf32>
    %29 = vector.shape_cast %28 : vector<1xf32> to vector<1x1x1xf32>
    %30 = vector.extract %29[0, 0, 0] : f32 from vector<1x1x1xf32>
    %cst_16 = arith.constant 5.600000e+01 : f32
    %31 = arith.divf %30, %cst_16 : f32
    %cst_17 = arith.constant 4.000000e+00 : f32
    %32 = arith.divf %31, %cst_17 : f32
    %cst_18 = arith.constant 0.000000e+00 : f32
    %33 = vector.broadcast %cst_18 : f32 to vector<8x8xf32>
    %cst_19 = arith.constant 0.000000e+00 : f32
    %34 = vector.broadcast %cst_19 : f32 to vector<8x8xf32>
    %35 = arith.subf %34, %26 : vector<8x8xf32>
    %cst_20 = arith.constant 1.000000e+00 : f32
    %36 = arith.mulf %32, %cst_20 : f32
    %37 = vector.broadcast %36 : f32 to vector<8x8xf32>
    %38 = arith.divf %35, %37 : vector<8x8xf32>
    %39 = math.exp %38 : vector<8x8xf32>
    %40 = arith.addf %33, %39 : vector<8x8xf32>
    %cst_21 = arith.constant 0.000000e+00 : f32
    %41 = vector.broadcast %cst_21 : f32 to vector<8x8xf32>
    %42 = arith.subf %41, %26 : vector<8x8xf32>
    %cst_22 = arith.constant 2.000000e+00 : f32
    %43 = arith.mulf %32, %cst_22 : f32
    %44 = vector.broadcast %43 : f32 to vector<8x8xf32>
    %45 = arith.divf %42, %44 : vector<8x8xf32>
    %46 = math.exp %45 : vector<8x8xf32>
    %47 = arith.addf %40, %46 : vector<8x8xf32>
    %cst_23 = arith.constant 0.000000e+00 : f32
    %48 = vector.broadcast %cst_23 : f32 to vector<8x8xf32>
    %49 = arith.subf %48, %26 : vector<8x8xf32>
    %cst_24 = arith.constant 4.000000e+00 : f32
    %50 = arith.mulf %32, %cst_24 : f32
    %51 = vector.broadcast %50 : f32 to vector<8x8xf32>
    %52 = arith.divf %49, %51 : vector<8x8xf32>
    %53 = math.exp %52 : vector<8x8xf32>
    %54 = arith.addf %47, %53 : vector<8x8xf32>
    %cst_25 = arith.constant 0.000000e+00 : f32
    %55 = vector.broadcast %cst_25 : f32 to vector<8x8xf32>
    %56 = arith.subf %55, %26 : vector<8x8xf32>
    %cst_26 = arith.constant 8.000000e+00 : f32
    %57 = arith.mulf %32, %cst_26 : f32
    %58 = vector.broadcast %57 : f32 to vector<8x8xf32>
    %59 = arith.divf %56, %58 : vector<8x8xf32>
    %60 = math.exp %59 : vector<8x8xf32>
    %61 = arith.addf %54, %60 : vector<8x8xf32>
    %cst_27 = arith.constant 0.000000e+00 : f32
    %62 = vector.broadcast %cst_27 : f32 to vector<8x8xf32>
    %63 = arith.subf %62, %26 : vector<8x8xf32>
    %cst_28 = arith.constant 1.600000e+01 : f32
    %64 = arith.mulf %32, %cst_28 : f32
    %65 = vector.broadcast %64 : f32 to vector<8x8xf32>
    %66 = arith.divf %63, %65 : vector<8x8xf32>
    %67 = math.exp %66 : vector<8x8xf32>
    %68 = arith.addf %61, %67 : vector<8x8xf32>
    %c4_i32 = arith.constant 4 : i32
    %69 = vector.broadcast %c4_i32 : i32 to vector<8x8xi32>
    %70 = arith.cmpi slt, %10, %69 : vector<8x8xi32>
    %c4_i32_29 = arith.constant 4 : i32
    %71 = vector.broadcast %c4_i32_29 : i32 to vector<8x8xi32>
    %72 = arith.cmpi slt, %11, %71 : vector<8x8xi32>
    %73 = arith.xori %70, %72 : vector<8x8xi1>
    %cst_30 = arith.constant dense<true> : vector<8x8xi1>
    %74 = arith.xori %73, %cst_30 : vector<8x8xi1>
    %cst_31 = arith.constant 1.000000e+00 : f32
    %cst_32 = arith.constant -1.000000e+00 : f32
    %75 = vector.broadcast %cst_31 : f32 to vector<8x8xf32>
    %76 = vector.broadcast %cst_32 : f32 to vector<8x8xf32>
    %77 = arith.select %74, %75, %76 : vector<8x8xi1>, vector<8x8xf32>
    %78 = arith.mulf %77, %68 : vector<8x8xf32>
    %79 = vector.shape_cast %78 : vector<8x8xf32> to vector<1x8x8xf32>
    %cst_33 = arith.constant dense<0.000000e+00> : vector<1xf32>
    %80 = vector.multi_reduction <add>, %79, %cst_33 [1, 2] : vector<1x8x8xf32> to vector<1xf32>
    %81 = vector.shape_cast %80 : vector<1xf32> to vector<1x1x1xf32>
    %82 = vector.extract %81[0, 0, 0] : f32 from vector<1x1x1xf32>
    %cst_34 = arith.constant 1.600000e+01 : f32
    %83 = arith.divf %82, %cst_34 : f32
    %84 = vector.broadcast %83 : f32 to vector<1x1xf32>
    %c0_35 = arith.constant 0 : index
    %c0_36 = arith.constant 0 : index
    %85 = vector.load %arg5[%c0_35, %c0_36] : memref<1x1xf32, #tpu.memory_space<vmem>>, vector<1x1xf32>
    tpu.vector_store %arg5[%c0_35, %c0_36], %84 {strides = array<i32>} : memref<1x1xf32, #tpu.memory_space<vmem>>, vector<1x1xf32>,
    return
  }
}

</mosaic_0001>

<llo_original>
// kernel: batch_program_classifier_forward.5
$region0: #{batch_program_classifier_forward.5}
  #allocation0 [shape = 'u32[]', space=smem, size = 0x4, offset = 0x4, fixed_abs, tag = 'smem constant byte address 0x4 - core index']
  #allocation1 [shape = 'u32[144,128]{1,0:T(1,128)}', space=vmem, size = 0x12000, scoped, tag = 'internal scratch']
  %s0 = inlined_call_operand.vmem [shape: f32[8,84], index: 0, kind: input, shape index: {}]
  %s1 = inlined_call_operand.vmem [shape: f32[84,8], index: 1, kind: input, shape index: {}]
  %s2 = inlined_call_operand.vmem [shape: f32[84,8], index: 2, kind: input, shape index: {}]
  %s3 = inlined_call_operand.vmem [shape: f32[1,8], index: 3, kind: input, shape index: {}]
  %s4 = inlined_call_operand.hbm [shape: f32[4,8], index: 4, kind: output, shape index: {0}]
  %s5 = inlined_call_operand.hbm [shape: f32[1,1], index: 5, kind: output, shape index: {1}]
  %6 = xla_tuple %s4, %s5
  %s7 = sld [smem:[#allocation0]]
  $region34: #{batch_program_classifier_forward.5} parent=0
    _
  %s9 = ssub.s32 1, %s7
  %s10 = scalar_select 0, %s9, %s7
  $region1: #{batch_program_classifier_forward.5} parent=0
    #allocation2 [shape = 'u8[2048]{0}', space=vmem, size = 0x800, scoped, tag = 'output window, operand 0, single buffered']
    #allocation3 [shape = 's32[1]{0}', space=sflag, size = 0x4, scoped, tag = 'scoped memory for batch_program_classifier_forward.5']
    #allocation4 [shape = 'u8[512]{0}', space=vmem, size = 0x400, scoped, tag = 'output window, operand 1, single buffered']
    #allocation5 [shape = 's32[1]{0}', space=sflag, size = 0x4, scoped, tag = 'scoped memory for batch_program_classifier_forward.5']
    %11 = vsyncpa [#allocation3], 0
    %12 = vsyncpa [#allocation5], 0
    // Predicated region
    $region2: #{batch_program_classifier_forward.5} parent=1 // pred_check
      _
    $region3: #{batch_program_classifier_forward.5} parent=1 // pred_check_branch
      %14 = sbr.rel (0) target = $region5
    $region4: #{batch_program_classifier_forward.5} parent=1 // pred_region
      _
    $region5: #{batch_program_classifier_forward.5} parent=1 // pred_fallthru
      _
    // Predicated region
    $region6: #{batch_program_classifier_forward.5} parent=1 // pred_check
      _
    $region7: #{batch_program_classifier_forward.5} parent=1 // pred_check_branch
      %16 = sbr.rel (0) target = $region9
    $region8: #{batch_program_classifier_forward.5} parent=1 // pred_region
      _
    $region9: #{batch_program_classifier_forward.5} parent=1 // pred_fallthru
      _
    // Predicated region
    $region10: #{batch_program_classifier_forward.5} parent=1 // pred_check
      _
    $region11: #{batch_program_classifier_forward.5} parent=1 // pred_check_branch
      %18 = sbr.rel (0) target = $region13
    $region12: #{batch_program_classifier_forward.5} parent=1 // pred_region
      _
    $region13: #{batch_program_classifier_forward.5} parent=1 // pred_fallthru
      _
    // Predicated region
    $region14: #{batch_program_classifier_forward.5} parent=1 // pred_check
      _
    $region15: #{batch_program_classifier_forward.5} parent=1 // pred_check_branch
      %20 = sbr.rel (0) target = $region17
    $region16: #{batch_program_classifier_forward.5} parent=1 // pred_region
      _
    $region17: #{batch_program_classifier_forward.5} parent=1 // pred_fallthru
      _
    %v21 = vld [vmem:[%s0] sm:$0xff]
    %v22 = vld [vmem:[%s2] sm:$0xff]
    %v23 = vld [vmem:[%s2 + $0x8] sm:$0xff]
    %v24 = vld [vmem:[%s2 + $0x10] sm:$0xff]
    %v25 = vld [vmem:[%s2 + $0x18] sm:$0xff]
    %v26 = vld [vmem:[%s2 + $0x20] sm:$0xff]
    %v27 = vld [vmem:[%s2 + $0x28] sm:$0xff]
    %v28 = vld [vmem:[%s2 + $0x30] sm:$0xff]
    %v29 = vld [vmem:[%s2 + $0x38] sm:$0xff]
    %v30 = vld [vmem:[%s2 + $0x40] sm:$0xff]
    %v31 = vld [vmem:[%s2 + $0x48] sm:$0xff]
    %v32 = vld [vmem:[%s2 + $0x50] sm:$0xf]
    %v33 = vld [vmem:[%s3] sm:$0x1]
    %v35 = vlaneseq
    %v36 = vshrl.u32 %v35, 7
    %v37 = vsub.s32 0, %v36
    %v38 = vrot.slane %v33, %v37
    %vm40 = vcmask 687104
    %v42 = vsel %vm40, %v21, 0
    %vm44 = vcmask 1043456
    %v46 = vsel %vm44, %v32, 0
    %48 = vmatprep.subr.mxu0 0.0
    %49 = vmatpush1.msra.mxu0 %v22
    %50 = vmatprep.subr.mxu0 0.0
    %51 = vmatpush1.msra.mxu0 %v23
    %52 = vmatprep.subr.mxu0 0.0
    %53 = vmatpush1.msra.mxu0 %v24
    %54 = vmatprep.subr.mxu0 0.0
    %55 = vmatpush1.msra.mxu0 %v25
    %56 = vmatprep.subr.mxu0 0.0
    %57 = vmatpush1.msra.mxu0 %v26
    %58 = vmatprep.subr.mxu0 0.0
    %59 = vmatpush1.msra.mxu0 %v27
    %60 = vmatprep.subr.mxu0 0.0
    %61 = vmatpush1.msra.mxu0 %v28
    %62 = vmatprep.subr.mxu0 0.0
    %63 = vmatpush1.msra.mxu0 %v29
    %64 = vmatprep.subr.mxu0 0.0
    %65 = vmatpush1.msra.mxu0 %v30
    %66 = vmatprep.subr.mxu0 0.0
    %67 = vmatpush1.msra.mxu0 %v31
    %68 = vmatprep.subr.mxu0 0.0
    %69 = vmatpush1.msra.mxu0 %v46
    %70 = vmatprep.subr.mxu0 0.0
    %71 = vmatpush1.msra.mxu0 0.0
    %72 = vmatprep.subr.mxu0 0.0
    %73 = vmatpush1.msra.mxu0 0.0
    %74 = vmatprep.subr.mxu0 0.0
    %75 = vmatpush1.msra.mxu0 0.0
    %76 = vmatprep.subr.mxu0 0.0
    %77 = vmatpush1.msra.mxu0 0.0
    %78 = vmatprep.subr.mxu0 0.0
    %79 = vmatpush1.msra.mxu0 0.0
    %80 = vmatprep.subr.mxu0 0.0
    %81 = vmatpush1.msra.mxu0 0.0
    %82 = vmatprep.subr.mxu0 0.0
    %83 = vmatpush1.msra.mxu0 0.0
    %84 = vmatprep.subr.mxu0 0.0
    %85 = vmatpush1.msra.mxu0 0.0
    %86 = vmatprep.subr.mxu0 0.0
    %87 = vmatpush1.msra.mxu0 0.0
    %88 = vmatprep.subr.mxu0 0.0
    %89 = vmatpush1.msra.mxu0 0.0
    %90 = vmatprep.subr.mxu0 0.0
    %91 = vmatpush1.msra.mxu0 0.0
    %92 = vmatprep.subr.mxu0 0.0
    %93 = vmatpush1.msra.mxu0 0.0
    %94 = vmatprep.subr.mxu0 0.0
    %95 = vmatpush1.msra.mxu0 0.0
    %96 = vmatprep.subr.mxu0 0.0
    %97 = vmatpush1.msra.mxu0 0.0
    %98 = vmatprep.subr.mxu0 0.0
    %99 = vmatpush1.msra.mxu0 0.0
    %100 = vmatprep.subr.mxu0 0.0
    %101 = vmatpush1.msra.mxu0 0.0
    %102 = vmatprep.subr.mxu0 0.0
    %103 = vmatpush1.msra.mxu0 0.0
    %104 = vmatprep.subr.mxu0 0.0
    %105 = vmatpush1.msra.mxu0 0.0
    %106 = vmatprep.subr.mxu0 0.0
    %107 = vmatpush1.msra.mxu0 0.0
    %108 = vmatprep.subr.mxu0 0.0
    %109 = vmatpush1.msra.mxu0 0.0
    %110 = vmatprep.subr.mxu0 0.0
    %111 = vmatpush1.msra.mxu0 0.0
    %112 = vmatprep.mubr.f32.mxu0 0.0
    %113 = vmatmul.mubr.f32.gmra.mrb[0].mxu0 %v42
    %v114 = vpop.f32.mrb[0].mxu0
    %v115 = vadd.f32 %v38, %v114
    %v116 = vpop.f32.mrb[0].mxu0
    %117 = vdwg.mxu0
    %vm118 = vcmask 60416
    %119 = vst.msk [vmem:[#allocation2] sm:$0xf] %vm118, %v115
    %v120 = vld [vmem:[%s1] sm:$0xff]
    %v121 = vld [vmem:[%s1 + $0x8] sm:$0xff]
    %v122 = vld [vmem:[%s1 + $0x10] sm:$0xff]
    %v123 = vld [vmem:[%s1 + $0x18] sm:$0xff]
    %v124 = vld [vmem:[%s1 + $0x20] sm:$0xff]
    %v125 = vld [vmem:[%s1 + $0x28] sm:$0xff]
    %v126 = vld [vmem:[%s1 + $0x30] sm:$0xff]
    %v127 = vld [vmem:[%s1 + $0x38] sm:$0xff]
    %v128 = vld [vmem:[%s1 + $0x40] sm:$0xff]
    %v129 = vld [vmem:[%s1 + $0x48] sm:$0xff]
    %v130 = vld [vmem:[%s1 + $0x50] sm:$0xf]
    %v132 = vsel %vm44, %v130, 0
    %134 = vmatprep.subr.mxu0 0.0
    %135 = vmatpush1.msra.mxu0 %v120
    %136 = vmatprep.subr.mxu0 0.0
    %137 = vmatpush1.msra.mxu0 %v121
    %138 = vmatprep.subr.mxu0 0.0
    %139 = vmatpush1.msra.mxu0 %v122
    %140 = vmatprep.subr.mxu0 0.0
    %141 = vmatpush1.msra.mxu0 %v123
    %142 = vmatprep.subr.mxu0 0.0
    %143 = vmatpush1.msra.mxu0 %v124
    %144 = vmatprep.subr.mxu0 0.0
    %145 = vmatpush1.msra.mxu0 %v125
    %146 = vmatprep.subr.mxu0 0.0
    %147 = vmatpush1.msra.mxu0 %v126
    %148 = vmatprep.subr.mxu0 0.0
    %149 = vmatpush1.msra.mxu0 %v127
    %150 = vmatprep.subr.mxu0 0.0
    %151 = vmatpush1.msra.mxu0 %v128
    %152 = vmatprep.subr.mxu0 0.0
    %153 = vmatpush1.msra.mxu0 %v129
    %154 = vmatprep.subr.mxu0 0.0
    %155 = vmatpush1.msra.mxu0 %v132
    %156 = vmatprep.subr.mxu0 0.0
    %157 = vmatpush1.msra.mxu0 0.0
    %158 = vmatprep.subr.mxu0 0.0
    %159 = vmatpush1.msra.mxu0 0.0
    %160 = vmatprep.subr.mxu0 0.0
    %161 = vmatpush1.msra.mxu0 0.0
    %162 = vmatprep.subr.mxu0 0.0
    %163 = vmatpush1.msra.mxu0 0.0
    %164 = vmatprep.subr.mxu0 0.0
    %165 = vmatpush1.msra.mxu0 0.0
    %166 = vmatprep.subr.mxu0 0.0
    %167 = vmatpush1.msra.mxu0 0.0
    %168 = vmatprep.subr.mxu0 0.0
    %169 = vmatpush1.msra.mxu0 0.0
    %170 = vmatprep.subr.mxu0 0.0
    %171 = vmatpush1.msra.mxu0 0.0
    %172 = vmatprep.subr.mxu0 0.0
    %173 = vmatpush1.msra.mxu0 0.0
    %174 = vmatprep.subr.mxu0 0.0
    %175 = vmatpush1.msra.mxu0 0.0
    %176 = vmatprep.subr.mxu0 0.0
    %177 = vmatpush1.msra.mxu0 0.0
    %178 = vmatprep.subr.mxu0 0.0
    %179 = vmatpush1.msra.mxu0 0.0
    %180 = vmatprep.subr.mxu0 0.0
    %181 = vmatpush1.msra.mxu0 0.0
    %182 = vmatprep.subr.mxu0 0.0
    %183 = vmatpush1.msra.mxu0 0.0
    %184 = vmatprep.subr.mxu0 0.0
    %185 = vmatpush1.msra.mxu0 0.0
    %186 = vmatprep.subr.mxu0 0.0
    %187 = vmatpush1.msra.mxu0 0.0
    %188 = vmatprep.subr.mxu0 0.0
    %189 = vmatpush1.msra.mxu0 0.0
    %190 = vmatprep.subr.mxu0 0.0
    %191 = vmatpush1.msra.mxu0 0.0
    %192 = vmatprep.subr.mxu0 0.0
    %193 = vmatpush1.msra.mxu0 0.0
    %194 = vmatprep.subr.mxu0 0.0
    %195 = vmatpush1.msra.mxu0 0.0
    %196 = vmatprep.subr.mxu0 0.0
    %197 = vmatpush1.msra.mxu0 0.0
    %198 = vmatprep.mubr.f32.mxu0 0.0
    %199 = vmatmul.mubr.f32.gmra.mrb[0].mxu0 %v42
    %v200 = vpop.f32.mrb[0].mxu0
    %v201 = vadd.f32 0.0, %v200
    %v202 = vpop.f32.mrb[0].mxu0
    %203 = vdwg.mxu0
    %v204 = vlaneseq
    %v205 = vshrl.u32 %v204, 7
    %v206 = vlaneseq
    %v207 = vand.u32 %v206, 127
    %vm208 = vcmp.eq.s32.totalorder %v205, %v207
    %v209 = vsel %vm208, %v201, 0.0
    %vm210 = vcmask 64512
    %v211 = vsel %vm210, %v209, 0.0
    %212 = vadd.xlane.f32.xlu0 %v211
    %v213 = vpop.xlane.xlu0 %212
    %v214 = vrot.slane %v211, 4
    %v215 = vadd.f32 %v211, %v214
    %v216 = vrot.slane %v215, 2
    %v217 = vadd.f32 %v215, %v216
    %v218 = vrot.slane %v217, 1
    %v219 = vadd.f32 %v217, %v218
    %v220 = vadd.f32 %v213, %v219
    %v221 = vmul.f32 %v201, 2.0
    %v222 = vsub.f32 %v220, %v221
    %v223 = vmax.f32 %v222, 0.0
    %v224 = vsel %vm210, %v223, 0.0
    %225 = vadd.xlane.f32.xlu0 %v224
    %v226 = vpop.xlane.xlu0 %225
    %v227 = vrot.slane %v226, 4
    %v228 = vadd.f32 %v226, %v227
    %v229 = vrot.slane %v228, 2
    %v230 = vadd.f32 %v228, %v229
    %v231 = vrot.slane %v230, 1
    %v232 = vadd.f32 %v230, %v231
    %s233 = vtos %v232
    %v234 = vrcp.pop 56.0
    %s235 = vtos %v234
    %s236 = smul.f32 %s233, %s235
    %v237 = vrcp.pop 4.0
    %s238 = vtos %v237
    %s239 = smul.f32 %s236, %s238
    %v240 = vsub.f32 0.0, %v223
    %v241 = vstv %s239
    %v242 = vrcp.pop %v241
    %v243 = vmul.f32 %v240, %v242
    %v244 = vmul.f32 %v243, 1.442695
    %v245 = vpow.pop %v244
    %v246 = vadd.f32 %v245, 0.0
    %s247 = smul.f32 %s239, 2.0
    %v248 = vstv %s247
    %v249 = vrcp.pop %v248
    %v250 = vmul.f32 %v240, %v249
    %v251 = vmul.f32 %v250, 1.442695
    %v252 = vpow.pop %v251
    %v253 = vadd.f32 %v246, %v252
    %s254 = smul.f32 %s239, 4.0
    %v255 = vstv %s254
    %v256 = vrcp.pop %v255
    %v257 = vmul.f32 %v240, %v256
    %v258 = vmul.f32 %v257, 1.442695
    %v259 = vpow.pop %v258
    %v260 = vadd.f32 %v253, %v259
    %s261 = smul.f32 %s239, 8.0
    %v262 = vstv %s261
    %v263 = vrcp.pop %v262
    %v264 = vmul.f32 %v240, %v263
    %v265 = vmul.f32 %v264, 1.442695
    %v266 = vpow.pop %v265
    %v267 = vadd.f32 %v260, %v266
    %s268 = smul.f32 %s239, 16.0
    %v269 = vstv %s268
    %v270 = vrcp.pop %v269
    %v271 = vmul.f32 %v240, %v270
    %v272 = vmul.f32 %v271, 1.442695
    %v273 = vpow.pop %v272
    %v274 = vadd.f32 %v267, %v273
    %vm275 = vcmp.lt.s32.totalorder %v205, 4
    %vm276 = vcmp.lt.s32.totalorder %v207, 4
    %vm277 = vmxor %vm275, %vm276
    %vm278 = vmxor %vm277, 1
    %v279 = vsel %vm278, 1.0, -1.0
    %v280 = vmul.f32 %v279, %v274
    %v281 = vsel %vm210, %v280, 0.0
    %282 = vadd.xlane.f32.xlu0 %v281
    %v283 = vpop.xlane.xlu0 %282
    %v284 = vrot.slane %v283, 4
    %v285 = vadd.f32 %v283, %v284
    %v286 = vrot.slane %v285, 2
    %v287 = vadd.f32 %v285, %v286
    %v288 = vrot.slane %v287, 1
    %v289 = vadd.f32 %v287, %v288
    %s290 = vtos %v289
    %v291 = vrcp.pop 16.0
    %s292 = vtos %v291
    %s293 = smul.f32 %s290, %s292
    %v294 = vstv %s293
    %vm295 = vcmask 0
    %296 = vst.msk [vmem:[#allocation4] sm:$0x1] %vm295, %v294
    // Predicated region
    $region18: #{batch_program_classifier_forward.5} parent=1 // pred_check
      _
    $region19: #{batch_program_classifier_forward.5} parent=1 // pred_check_branch
      %298 = sbr.rel (0) target = $region21
    $region20: #{batch_program_classifier_forward.5} parent=1 // pred_region
      %s300 = ssub.s32 64, 64
      %301 = vsyncadd [#allocation3], %s300
      %s303 = sshll.u32 [#allocation2], 4
      %s304 = int_to_ptr.vmem [resolvable:$true] %s303
      %306 = dma.vmem_to_hbm [thread:$0]  %s304, 64, %s4, [#allocation3]
    $region21: #{batch_program_classifier_forward.5} parent=1 // pred_fallthru
      _
    // Predicated region
    $region22: #{batch_program_classifier_forward.5} parent=1 // pred_check
      _
    $region23: #{batch_program_classifier_forward.5} parent=1 // pred_check_branch
      %308 = sbr.rel (0) target = $region25
    $region24: #{batch_program_classifier_forward.5} parent=1 // pred_region
      %s310 = ssub.s32 16, 16
      %311 = vsyncadd [#allocation5], %s310
      %s313 = sshll.u32 [#allocation4], 4
      %s314 = int_to_ptr.vmem [resolvable:$true] %s313
      %316 = dma.vmem_to_hbm [thread:$0]  %s314, 16, %s5, [#allocation5]
    $region25: #{batch_program_classifier_forward.5} parent=1 // pred_fallthru
      _
    // Predicated region
    $region26: #{batch_program_classifier_forward.5} parent=1 // pred_check
      _
    $region27: #{batch_program_classifier_forward.5} parent=1 // pred_check_branch
      %318 = sbr.rel (0) target = $region29
    $region28: #{batch_program_classifier_forward.5} parent=1 // pred_region
      %319 = dma.done [#allocation3], 64
    $region29: #{batch_program_classifier_forward.5} parent=1 // pred_fallthru
      _
    // Predicated region
    $region30: #{batch_program_classifier_forward.5} parent=1 // pred_check
      _
    $region31: #{batch_program_classifier_forward.5} parent=1 // pred_check_branch
      %321 = sbr.rel (0) target = $region33
    $region32: #{batch_program_classifier_forward.5} parent=1 // pred_region
      %322 = dma.done [#allocation5], 16
    $region33: #{batch_program_classifier_forward.5} parent=1 // pred_fallthru
      _
    %323 = vsyncpa [#allocation3], 1
    %324 = vsyncpa [#allocation5], 1

// kernel: batch_program_classifier_forward.4
$region0: #{batch_program_classifier_forward.4}
  #allocation0 [shape = 'u32[]', space=smem, size = 0x4, offset = 0x4, fixed_abs, tag = 'smem constant byte address 0x4 - core index']
  #allocation1 [shape = 'u32[144,128]{1,0:T(1,128)}', space=vmem, size = 0x12000, scoped, tag = 'internal scratch']
  %s0 = inlined_call_operand.vmem [shape: f32[4,8,96], index: 0, kind: input, shape index: {}]
  %s1 = inlined_call_operand.vmem [shape: f32[4,8,96], index: 1, kind: input, shape index: {}]
  %s2 = inlined_call_operand.vmem [shape: f32[32,96], index: 2, kind: input, shape index: {}]
  %s3 = inlined_call_operand.vmem [shape: f32[1,96], index: 3, kind: input, shape index: {}]
  %s4 = inlined_call_operand.vmem [shape: f32[32,96], index: 4, kind: input, shape index: {}]
  %s5 = inlined_call_operand.vmem [shape: f32[1,96], index: 5, kind: input, shape index: {}]
  %s6 = inlined_call_operand.vmem [shape: f32[8,64], index: 6, kind: output, shape index: {}]
  %s7 = sld [smem:[#allocation0]]
  $region41: #{batch_program_classifier_forward.4} parent=0
    _
  %s9 = ssub.s32 1, %s7
  %s10 = scalar_select 0, %s9, %s7
  // Predicated region
  $region2: #{batch_program_classifier_forward.4} parent=0 // pred_check
    _
  $region3: #{batch_program_classifier_forward.4} parent=0 // pred_check_branch
    %12 = sbr.rel (0) target = $region5
  $region4: #{batch_program_classifier_forward.4} parent=0 // pred_region
    _
  $region5: #{batch_program_classifier_forward.4} parent=0 // pred_fallthru
    _
  // Predicated region
  $region6: #{batch_program_classifier_forward.4} parent=0 // pred_check
    _
  $region7: #{batch_program_classifier_forward.4} parent=0 // pred_check_branch
    %14 = sbr.rel (0) target = $region9
  $region8: #{batch_program_classifier_forward.4} parent=0 // pred_region
    _
  $region9: #{batch_program_classifier_forward.4} parent=0 // pred_fallthru
    _
  // Predicated region
  $region10: #{batch_program_classifier_forward.4} parent=0 // pred_check
    _
  $region11: #{batch_program_classifier_forward.4} parent=0 // pred_check_branch
    %16 = sbr.rel (0) target = $region13
  $region12: #{batch_program_classifier_forward.4} parent=0 // pred_region
    _
  $region13: #{batch_program_classifier_forward.4} parent=0 // pred_fallthru
    _
  // Predicated region
  $region14: #{batch_program_classifier_forward.4} parent=0 // pred_check
    _
  $region15: #{batch_program_classifier_forward.4} parent=0 // pred_check_branch
    %18 = sbr.rel (0) target = $region17
  $region16: #{batch_program_classifier_forward.4} parent=0 // pred_region
    _
  $region17: #{batch_program_classifier_forward.4} parent=0 // pred_fallthru
    _
  // Predicated region
  $region18: #{batch_program_classifier_forward.4} parent=0 // pred_check
    _
  $region19: #{batch_program_classifier_forward.4} parent=0 // pred_check_branch
    %20 = sbr.rel (0) target = $region21
  $region20: #{batch_program_classifier_forward.4} parent=0 // pred_region
    _
  $region21: #{batch_program_classifier_forward.4} parent=0 // pred_fallthru
    _
  // Predicated region
  $region22: #{batch_program_classifier_forward.4} parent=0 // pred_check
    _
  $region23: #{batch_program_classifier_forward.4} parent=0 // pred_check_branch
    %22 = sbr.rel (0) target = $region25
  $region24: #{batch_program_classifier_forward.4} parent=0 // pred_region
    _
  $region25: #{batch_program_classifier_forward.4} parent=0 // pred_fallthru
    _
  %v23 = vld [vmem:[%s2] sm:$0xff]
  %v24 = vld [vmem:[%s2 + $0x8] sm:$0xff]
  %v25 = vld [vmem:[%s2 + $0x10] sm:$0xff]
  %v26 = vld [vmem:[%s2 + $0x18] sm:$0xff]
  %v27 = vld [vmem:[%s3] sm:$0x1]
  %v28 = vld [vmem:[%s4] sm:$0xff]
  %v29 = vld [vmem:[%s4 + $0x8] sm:$0xff]
  %v30 = vld [vmem:[%s4 + $0x10] sm:$0xff]
  %v31 = vld [vmem:[%s4 + $0x18] sm:$0xff]
  %v32 = vld [vmem:[%s5] sm:$0x1]
  loop: start=0, step=1, limit=2
  $region26: #{batch_program_classifier_forward.4} parent=0 // loop_pre_header
    _
  $region27: #{batch_program_classifier_forward.4} parent=0 // loop_header
    %s34 = sphi 0, %s38
    %p35 = scmp.ge.s32.totalorder %s34, 2
    %v39 = vphi 0.0, %v373
    %v40 = vphi 0.0, %v477
    %v41 = vphi -1e+30, %v478
    %v42 = vphi -1e+30, %v479
  $region28: #{batch_program_classifier_forward.4} parent=0 // loop_header_branch
    %37 = sbr.rel (%p35) target = $region32
  $region29: #{batch_program_classifier_forward.4} parent=0 // loop_body
    %s43 = smul.u32 %s34, 2
    %s44 = ssub.s32 3, %s43
    %s45 = smul.u32 %s43, 8
    %s46 = scalar_lea.vmem %s0, %s45
    %v47 = vld [vmem:[%s46] sm:$0xff]
    %v49 = vlaneseq
    %v50 = vshrl.u32 %v49, 7
    %v51 = vsub.s32 0, %v50
    %v52 = vrot.slane %v27, %v51
    %55 = vrot.lane.b32.xlu0 %v39, 96
    %v56 = vpop.permute.xlu0 %55
    %vm57 = vcmask 261120
    %v58 = vsel %vm57, %v56, 0
    %60 = vmatprep.subr.mxu0 0.0
    %61 = vmatpush1.msra.mxu0 %v23
    %62 = vmatprep.subr.mxu0 0.0
    %63 = vmatpush1.msra.mxu0 %v24
    %64 = vmatprep.subr.mxu0 0.0
    %65 = vmatpush1.msra.mxu0 %v25
    %66 = vmatprep.subr.mxu0 0.0
    %67 = vmatpush1.msra.mxu0 %v26
    %68 = vmatprep.subr.mxu0 0.0
    %69 = vmatpush1.msra.mxu0 0.0
    %70 = vmatprep.subr.mxu0 0.0
    %71 = vmatpush1.msra.mxu0 0.0
    %72 = vmatprep.subr.mxu0 0.0
    %73 = vmatpush1.msra.mxu0 0.0
    %74 = vmatprep.subr.mxu0 0.0
    %75 = vmatpush1.msra.mxu0 0.0
    %76 = vmatprep.subr.mxu0 0.0
    %77 = vmatpush1.msra.mxu0 0.0
    %78 = vmatprep.subr.mxu0 0.0
    %79 = vmatpush1.msra.mxu0 0.0
    %80 = vmatprep.subr.mxu0 0.0
    %81 = vmatpush1.msra.mxu0 0.0
    %82 = vmatprep.subr.mxu0 0.0
    %83 = vmatpush1.msra.mxu0 0.0
    %84 = vmatprep.subr.mxu0 0.0
    %85 = vmatpush1.msra.mxu0 0.0
    %86 = vmatprep.subr.mxu0 0.0
    %87 = vmatpush1.msra.mxu0 0.0
    %88 = vmatprep.subr.mxu0 0.0
    %89 = vmatpush1.msra.mxu0 0.0
    %90 = vmatprep.subr.mxu0 0.0
    %91 = vmatpush1.msra.mxu0 0.0
    %92 = vmatprep.subr.mxu0 0.0
    %93 = vmatpush1.msra.mxu0 0.0
    %94 = vmatprep.subr.mxu0 0.0
    %95 = vmatpush1.msra.mxu0 0.0
    %96 = vmatprep.subr.mxu0 0.0
    %97 = vmatpush1.msra.mxu0 0.0
    %98 = vmatprep.subr.mxu0 0.0
    %99 = vmatpush1.msra.mxu0 0.0
    %100 = vmatprep.subr.mxu0 0.0
    %101 = vmatpush1.msra.mxu0 0.0
    %102 = vmatprep.subr.mxu0 0.0
    %103 = vmatpush1.msra.mxu0 0.0
    %104 = vmatprep.subr.mxu0 0.0
    %105 = vmatpush1.msra.mxu0 0.0
    %106 = vmatprep.subr.mxu0 0.0
    %107 = vmatpush1.msra.mxu0 0.0
    %108 = vmatprep.subr.mxu0 0.0
    %109 = vmatpush1.msra.mxu0 0.0
    %110 = vmatprep.subr.mxu0 0.0
    %111 = vmatpush1.msra.mxu0 0.0
    %112 = vmatprep.subr.mxu0 0.0
    %113 = vmatpush1.msra.mxu0 0.0
    %114 = vmatprep.subr.mxu0 0.0
    %115 = vmatpush1.msra.mxu0 0.0
    %116 = vmatprep.subr.mxu0 0.0
    %117 = vmatpush1.msra.mxu0 0.0
    %118 = vmatprep.subr.mxu0 0.0
    %119 = vmatpush1.msra.mxu0 0.0
    %120 = vmatprep.subr.mxu0 0.0
    %121 = vmatpush1.msra.mxu0 0.0
    %122 = vmatprep.subr.mxu0 0.0
    %123 = vmatpush1.msra.mxu0 0.0
    %124 = vmatprep.mubr.f32.mxu0 0.0
    %125 = vmatmul.mubr.f32.gmra.mrb[0].mxu0 %v58
    %v126 = vpop.f32.mrb[0].mxu0
    %v127 = vadd.f32 %v52, %v126
    %v128 = vpop.f32.mrb[0].mxu0
    %129 = vdwg.mxu0
    %v130 = vadd.f32 %v47, %v127
    %v131 = vxor.u32 %v130, 2147483648
    %v132 = vmul.f32 %v131, 1.442695
    %v133 = vpow.pop %v132
    %v134 = vadd.f32 %v133, 1.0
    %v135 = vrcp.pop %v134
    %v136 = vmul.f32 1.0, %v135
    %138 = vrot.lane.b32.xlu0 %v127, 64
    %v139 = vpop.permute.xlu0 %138
    %v141 = vmul.f32 %v136, %v139
    %143 = vrot.lane.b32.xlu0 %v141, 64
    %v144 = vpop.permute.xlu0 %143
    %v146 = vadd.f32 %v47, %v144
    %v147 = vtanh.pop %v146
    %v148 = vsub.f32 1.0, %v136
    %150 = vrot.lane.b32.xlu0 %v147, 96
    %v151 = vpop.permute.xlu0 %150
    %v153 = vmul.f32 %v148, %v151
    %v154 = vmul.f32 %v136, %v39
    %v155 = vadd.f32 %v153, %v154
    %s156 = smul.u32 %s44, 8
    %s157 = scalar_lea.vmem %s1, %s156
    %v158 = vld [vmem:[%s157] sm:$0xff]
    %v160 = vlaneseq
    %v161 = vshrl.u32 %v160, 7
    %v162 = vsub.s32 0, %v161
    %v163 = vrot.slane %v32, %v162
    %166 = vrot.lane.b32.xlu0 %v40, 96
    %v167 = vpop.permute.xlu0 %166
    %v168 = vsel %vm57, %v167, 0
    %170 = vmatprep.subr.mxu0 0.0
    %171 = vmatpush1.msra.mxu0 %v28
    %172 = vmatprep.subr.mxu0 0.0
    %173 = vmatpush1.msra.mxu0 %v29
    %174 = vmatprep.subr.mxu0 0.0
    %175 = vmatpush1.msra.mxu0 %v30
    %176 = vmatprep.subr.mxu0 0.0
    %177 = vmatpush1.msra.mxu0 %v31
    %178 = vmatprep.subr.mxu0 0.0
    %179 = vmatpush1.msra.mxu0 0.0
    %180 = vmatprep.subr.mxu0 0.0
    %181 = vmatpush1.msra.mxu0 0.0
    %182 = vmatprep.subr.mxu0 0.0
    %183 = vmatpush1.msra.mxu0 0.0
    %184 = vmatprep.subr.mxu0 0.0
    %185 = vmatpush1.msra.mxu0 0.0
    %186 = vmatprep.subr.mxu0 0.0
    %187 = vmatpush1.msra.mxu0 0.0
    %188 = vmatprep.subr.mxu0 0.0
    %189 = vmatpush1.msra.mxu0 0.0
    %190 = vmatprep.subr.mxu0 0.0
    %191 = vmatpush1.msra.mxu0 0.0
    %192 = vmatprep.subr.mxu0 0.0
    %193 = vmatpush1.msra.mxu0 0.0
    %194 = vmatprep.subr.mxu0 0.0
    %195 = vmatpush1.msra.mxu0 0.0
    %196 = vmatprep.subr.mxu0 0.0
    %197 = vmatpush1.msra.mxu0 0.0
    %198 = vmatprep.subr.mxu0 0.0
    %199 = vmatpush1.msra.mxu0 0.0
    %200 = vmatprep.subr.mxu0 0.0
    %201 = vmatpush1.msra.mxu0 0.0
    %202 = vmatprep.subr.mxu0 0.0
    %203 = vmatpush1.msra.mxu0 0.0
    %204 = vmatprep.subr.mxu0 0.0
    %205 = vmatpush1.msra.mxu0 0.0
    %206 = vmatprep.subr.mxu0 0.0
    %207 = vmatpush1.msra.mxu0 0.0
    %208 = vmatprep.subr.mxu0 0.0
    %209 = vmatpush1.msra.mxu0 0.0
    %210 = vmatprep.subr.mxu0 0.0
    %211 = vmatpush1.msra.mxu0 0.0
    %212 = vmatprep.subr.mxu0 0.0
    %213 = vmatpush1.msra.mxu0 0.0
    %214 = vmatprep.subr.mxu0 0.0
    %215 = vmatpush1.msra.mxu0 0.0
    %216 = vmatprep.subr.mxu0 0.0
    %217 = vmatpush1.msra.mxu0 0.0
    %218 = vmatprep.subr.mxu0 0.0
    %219 = vmatpush1.msra.mxu0 0.0
    %220 = vmatprep.subr.mxu0 0.0
    %221 = vmatpush1.msra.mxu0 0.0
    %222 = vmatprep.subr.mxu0 0.0
    %223 = vmatpush1.msra.mxu0 0.0
    %224 = vmatprep.subr.mxu0 0.0
    %225 = vmatpush1.msra.mxu0 0.0
    %226 = vmatprep.subr.mxu0 0.0
    %227 = vmatpush1.msra.mxu0 0.0
    %228 = vmatprep.subr.mxu0 0.0
    %229 = vmatpush1.msra.mxu0 0.0
    %230 = vmatprep.subr.mxu0 0.0
    %231 = vmatpush1.msra.mxu0 0.0
    %232 = vmatprep.subr.mxu0 0.0
    %233 = vmatpush1.msra.mxu0 0.0
    %234 = vmatprep.mubr.f32.mxu0 0.0
    %235 = vmatmul.mubr.f32.gmra.mrb[0].mxu0 %v168
    %v236 = vpop.f32.mrb[0].mxu0
    %v237 = vadd.f32 %v163, %v236
    %v238 = vpop.f32.mrb[0].mxu0
    %239 = vdwg.mxu0
    %v240 = vadd.f32 %v158, %v237
    %v241 = vxor.u32 %v240, 2147483648
    %v242 = vmul.f32 %v241, 1.442695
    %v243 = vpow.pop %v242
    %v244 = vadd.f32 %v243, 1.0
    %v245 = vrcp.pop %v244
    %v246 = vmul.f32 1.0, %v245
    %248 = vrot.lane.b32.xlu0 %v237, 64
    %v249 = vpop.permute.xlu0 %248
    %v251 = vmul.f32 %v246, %v249
    %253 = vrot.lane.b32.xlu0 %v251, 64
    %v254 = vpop.permute.xlu0 %253
    %v256 = vadd.f32 %v158, %v254
    %v257 = vtanh.pop %v256
    %v258 = vsub.f32 1.0, %v246
    %260 = vrot.lane.b32.xlu0 %v257, 96
    %v261 = vpop.permute.xlu0 %260
    %v263 = vmul.f32 %v258, %v261
    %v264 = vmul.f32 %v246, %v40
    %v265 = vadd.f32 %v263, %v264
    %v266 = vmax.f32 %v41, %v155
    %v267 = vmax.f32 %v42, %v265
    %s268 = sadd.s32 %s43, 1
    %s269 = ssub.s32 2, %s43
    %s270 = smul.u32 %s268, 8
    %s271 = scalar_lea.vmem %s0, %s270
    %v272 = vld [vmem:[%s271] sm:$0xff]
    %274 = vrot.lane.b32.xlu0 %v155, 96
    %v275 = vpop.permute.xlu0 %274
    %v276 = vsel %vm57, %v275, 0
    %278 = vmatprep.subr.mxu0 0.0
    %279 = vmatpush1.msra.mxu0 %v23
    %280 = vmatprep.subr.mxu0 0.0
    %281 = vmatpush1.msra.mxu0 %v24
    %282 = vmatprep.subr.mxu0 0.0
    %283 = vmatpush1.msra.mxu0 %v25
    %284 = vmatprep.subr.mxu0 0.0
    %285 = vmatpush1.msra.mxu0 %v26
    %286 = vmatprep.subr.mxu0 0.0
    %287 = vmatpush1.msra.mxu0 0.0
    %288 = vmatprep.subr.mxu0 0.0
    %289 = vmatpush1.msra.mxu0 0.0
    %290 = vmatprep.subr.mxu0 0.0
    %291 = vmatpush1.msra.mxu0 0.0
    %292 = vmatprep.subr.mxu0 0.0
    %293 = vmatpush1.msra.mxu0 0.0
    %294 = vmatprep.subr.mxu0 0.0
    %295 = vmatpush1.msra.mxu0 0.0
    %296 = vmatprep.subr.mxu0 0.0
    %297 = vmatpush1.msra.mxu0 0.0
    %298 = vmatprep.subr.mxu0 0.0
    %299 = vmatpush1.msra.mxu0 0.0
    %300 = vmatprep.subr.mxu0 0.0
    %301 = vmatpush1.msra.mxu0 0.0
    %302 = vmatprep.subr.mxu0 0.0
    %303 = vmatpush1.msra.mxu0 0.0
    %304 = vmatprep.subr.mxu0 0.0
    %305 = vmatpush1.msra.mxu0 0.0
    %306 = vmatprep.subr.mxu0 0.0
    %307 = vmatpush1.msra.mxu0 0.0
    %308 = vmatprep.subr.mxu0 0.0
    %309 = vmatpush1.msra.mxu0 0.0
    %310 = vmatprep.subr.mxu0 0.0
    %311 = vmatpush1.msra.mxu0 0.0
    %312 = vmatprep.subr.mxu0 0.0
    %313 = vmatpush1.msra.mxu0 0.0
    %314 = vmatprep.subr.mxu0 0.0
    %315 = vmatpush1.msra.mxu0 0.0
    %316 = vmatprep.subr.mxu0 0.0
    %317 = vmatpush1.msra.mxu0 0.0
    %318 = vmatprep.subr.mxu0 0.0
    %319 = vmatpush1.msra.mxu0 0.0
    %320 = vmatprep.subr.mxu0 0.0
    %321 = vmatpush1.msra.mxu0 0.0
    %322 = vmatprep.subr.mxu0 0.0
    %323 = vmatpush1.msra.mxu0 0.0
    %324 = vmatprep.subr.mxu0 0.0
    %325 = vmatpush1.msra.mxu0 0.0
    %326 = vmatprep.subr.mxu0 0.0
    %327 = vmatpush1.msra.mxu0 0.0
    %328 = vmatprep.subr.mxu0 0.0
    %329 = vmatpush1.msra.mxu0 0.0
    %330 = vmatprep.subr.mxu0 0.0
    %331 = vmatpush1.msra.mxu0 0.0
    %332 = vmatprep.subr.mxu0 0.0
    %333 = vmatpush1.msra.mxu0 0.0
    %334 = vmatprep.subr.mxu0 0.0
    %335 = vmatpush1.msra.mxu0 0.0
    %336 = vmatprep.subr.mxu0 0.0
    %337 = vmatpush1.msra.mxu0 0.0
    %338 = vmatprep.subr.mxu0 0.0
    %339 = vmatpush1.msra.mxu0 0.0
    %340 = vmatprep.subr.mxu0 0.0
    %341 = vmatpush1.msra.mxu0 0.0
    %342 = vmatprep.mubr.f32.mxu0 0.0
    %343 = vmatmul.mubr.f32.gmra.mrb[0].mxu0 %v276
    %v344 = vpop.f32.mrb[0].mxu0
    %v345 = vadd.f32 %v52, %v344
    %v346 = vpop.f32.mrb[0].mxu0
    %347 = vdwg.mxu0
    %v348 = vadd.f32 %v272, %v345
    %v349 = vxor.u32 %v348, 2147483648
    %v350 = vmul.f32 %v349, 1.442695
    %v351 = vpow.pop %v350
    %v352 = vadd.f32 %v351, 1.0
    %v353 = vrcp.pop %v352
    %v354 = vmul.f32 1.0, %v353
    %356 = vrot.lane.b32.xlu0 %v345, 64
    %v357 = vpop.permute.xlu0 %356
    %v359 = vmul.f32 %v354, %v357
    %361 = vrot.lane.b32.xlu0 %v359, 64
    %v362 = vpop.permute.xlu0 %361
    %v364 = vadd.f32 %v272, %v362
    %v365 = vtanh.pop %v364
    %v366 = vsub.f32 1.0, %v354
    %368 = vrot.lane.b32.xlu0 %v365, 96
    %v369 = vpop.permute.xlu0 %368
    %v371 = vmul.f32 %v366, %v369
    %v372 = vmul.f32 %v354, %v155
    %v373 = vadd.f32 %v371, %v372
    %s374 = smul.u32 %s269, 8
    %s375 = scalar_lea.vmem %s1, %s374
    %v376 = vld [vmem:[%s375] sm:$0xff]
    %378 = vrot.lane.b32.xlu0 %v265, 96
    %v379 = vpop.permute.xlu0 %378
    %v380 = vsel %vm57, %v379, 0
    %382 = vmatprep.subr.mxu0 0.0
    %383 = vmatpush1.msra.mxu0 %v28
    %384 = vmatprep.subr.mxu0 0.0
    %385 = vmatpush1.msra.mxu0 %v29
    %386 = vmatprep.subr.mxu0 0.0
    %387 = vmatpush1.msra.mxu0 %v30
    %388 = vmatprep.subr.mxu0 0.0
    %389 = vmatpush1.msra.mxu0 %v31
    %390 = vmatprep.subr.mxu0 0.0
    %391 = vmatpush1.msra.mxu0 0.0
    %392 = vmatprep.subr.mxu0 0.0
    %393 = vmatpush1.msra.mxu0 0.0
    %394 = vmatprep.subr.mxu0 0.0
    %395 = vmatpush1.msra.mxu0 0.0
    %396 = vmatprep.subr.mxu0 0.0
    %397 = vmatpush1.msra.mxu0 0.0
    %398 = vmatprep.subr.mxu0 0.0
    %399 = vmatpush1.msra.mxu0 0.0
    %400 = vmatprep.subr.mxu0 0.0
    %401 = vmatpush1.msra.mxu0 0.0
    %402 = vmatprep.subr.mxu0 0.0
    %403 = vmatpush1.msra.mxu0 0.0
    %404 = vmatprep.subr.mxu0 0.0
    %405 = vmatpush1.msra.mxu0 0.0
    %406 = vmatprep.subr.mxu0 0.0
    %407 = vmatpush1.msra.mxu0 0.0
    %408 = vmatprep.subr.mxu0 0.0
    %409 = vmatpush1.msra.mxu0 0.0
    %410 = vmatprep.subr.mxu0 0.0
    %411 = vmatpush1.msra.mxu0 0.0
    %412 = vmatprep.subr.mxu0 0.0
    %413 = vmatpush1.msra.mxu0 0.0
    %414 = vmatprep.subr.mxu0 0.0
    %415 = vmatpush1.msra.mxu0 0.0
    %416 = vmatprep.subr.mxu0 0.0
    %417 = vmatpush1.msra.mxu0 0.0
    %418 = vmatprep.subr.mxu0 0.0
    %419 = vmatpush1.msra.mxu0 0.0
    %420 = vmatprep.subr.mxu0 0.0
    %421 = vmatpush1.msra.mxu0 0.0
    %422 = vmatprep.subr.mxu0 0.0
    %423 = vmatpush1.msra.mxu0 0.0
    %424 = vmatprep.subr.mxu0 0.0
    %425 = vmatpush1.msra.mxu0 0.0
    %426 = vmatprep.subr.mxu0 0.0
    %427 = vmatpush1.msra.mxu0 0.0
    %428 = vmatprep.subr.mxu0 0.0
    %429 = vmatpush1.msra.mxu0 0.0
    %430 = vmatprep.subr.mxu0 0.0
    %431 = vmatpush1.msra.mxu0 0.0
    %432 = vmatprep.subr.mxu0 0.0
    %433 = vmatpush1.msra.mxu0 0.0
    %434 = vmatprep.subr.mxu0 0.0
    %435 = vmatpush1.msra.mxu0 0.0
    %436 = vmatprep.subr.mxu0 0.0
    %437 = vmatpush1.msra.mxu0 0.0
    %438 = vmatprep.subr.mxu0 0.0
    %439 = vmatpush1.msra.mxu0 0.0
    %440 = vmatprep.subr.mxu0 0.0
    %441 = vmatpush1.msra.mxu0 0.0
    %442 = vmatprep.subr.mxu0 0.0
    %443 = vmatpush1.msra.mxu0 0.0
    %444 = vmatprep.subr.mxu0 0.0
    %445 = vmatpush1.msra.mxu0 0.0
    %446 = vmatprep.mubr.f32.mxu0 0.0
    %447 = vmatmul.mubr.f32.gmra.mrb[0].mxu0 %v380
    %v448 = vpop.f32.mrb[0].mxu0
    %v449 = vadd.f32 %v163, %v448
    %v450 = vpop.f32.mrb[0].mxu0
    %451 = vdwg.mxu0
    %v452 = vadd.f32 %v376, %v449
    %v453 = vxor.u32 %v452, 2147483648
    %v454 = vmul.f32 %v453, 1.442695
    %v455 = vpow.pop %v454
    %v456 = vadd.f32 %v455, 1.0
    %v457 = vrcp.pop %v456
    %v458 = vmul.f32 1.0, %v457
    %460 = vrot.lane.b32.xlu0 %v449, 64
    %v461 = vpop.permute.xlu0 %460
    %v463 = vmul.f32 %v458, %v461
    %465 = vrot.lane.b32.xlu0 %v463, 64
    %v466 = vpop.permute.xlu0 %465
    %v468 = vadd.f32 %v376, %v466
    %v469 = vtanh.pop %v468
    %v470 = vsub.f32 1.0, %v458
    %472 = vrot.lane.b32.xlu0 %v469, 96
    %v473 = vpop.permute.xlu0 %472
    %v475 = vmul.f32 %v470, %v473
    %v476 = vmul.f32 %v458, %v265
    %v477 = vadd.f32 %v475, %v476
    %v478 = vmax.f32 %v266, %v373
    %v479 = vmax.f32 %v267, %v477
  $region30: #{batch_program_classifier_forward.4} parent=0 // loop_footer
    %s38 = sadd.s32 1, %s34
  $region31: #{batch_program_classifier_forward.4} parent=0 // loop_footer_branch
    %33 = sbr.rel target = $region27
  $region32: #{batch_program_classifier_forward.4} parent=0 // loop_exit
    _
  %481 = vrot.lane.b32.xlu0 %v41, 96
  %v482 = vpop.permute.xlu0 %481
  %vm484 = vcmask 261120
  %v485 = vsel %vm484, %v482, %v42
  %vm486 = vcmask 523264
  %487 = vst.msk [vmem:[%s6] sm:$0xff] %vm486, %v485
  // Predicated region
  $region33: #{batch_program_classifier_forward.4} parent=0 // pred_check
    _
  $region34: #{batch_program_classifier_forward.4} parent=0 // pred_check_branch
    %489 = sbr.rel (0) target = $region36
  $region35: #{batch_program_classifier_forward.4} parent=0 // pred_region
    _
  $region36: #{batch_program_classifier_forward.4} parent=0 // pred_fallthru
    _
  // Predicated region
  $region37: #{batch_program_classifier_forward.4} parent=0 // pred_check
    _
  $region38: #{batch_program_classifier_forward.4} parent=0 // pred_check_branch
    %491 = sbr.rel (0) target = $region40
  $region39: #{batch_program_classifier_forward.4} parent=0 // pred_region
    _
  $region40: #{batch_program_classifier_forward.4} parent=0 // pred_fallthru
    _

// kernel: batch_program_classifier_forward.3
$region0: #{batch_program_classifier_forward.3}
  #allocation0 [shape = 'u32[]', space=smem, size = 0x4, offset = 0x4, fixed_abs, tag = 'smem constant byte address 0x4 - core index']
  #allocation1 [shape = 'u32[144,128]{1,0:T(1,128)}', space=vmem, size = 0x12000, scoped, tag = 'internal scratch']
  %s0 = inlined_call_operand.vmem [shape: bf16[256,16], index: 0, kind: input, shape index: {}]
  %s1 = inlined_call_operand.vmem [shape: f32[256,1], index: 1, kind: input, shape index: {}]
  %s2 = inlined_call_operand.vmem [shape: f32[32,1], index: 2, kind: input, shape index: {}]
  %s3 = inlined_call_operand.vmem [shape: bf16[16,32], index: 3, kind: input, shape index: {}]
  %s4 = inlined_call_operand.vmem [shape: f32[1,32], index: 4, kind: input, shape index: {}]
  %s5 = inlined_call_operand.vmem [shape: bf16[32,192], index: 5, kind: input, shape index: {}]
  %s6 = inlined_call_operand.vmem [shape: f32[1,192], index: 6, kind: input, shape index: {}]
  %s7 = inlined_call_operand.vmem [shape: f32[32,96], index: 7, kind: output, shape index: {0}]
  %s8 = inlined_call_operand.vmem [shape: f32[32,96], index: 8, kind: output, shape index: {1}]
  %9 = xla_tuple %s7, %s8
  %s10 = sld [smem:[#allocation0]]
  $region46: #{batch_program_classifier_forward.3} parent=0
    _
  %s12 = ssub.s32 1, %s10
  %s13 = scalar_select 0, %s12, %s10
  // Predicated region
  $region2: #{batch_program_classifier_forward.3} parent=0 // pred_check
    _
  $region3: #{batch_program_classifier_forward.3} parent=0 // pred_check_branch
    %15 = sbr.rel (0) target = $region5
  $region4: #{batch_program_classifier_forward.3} parent=0 // pred_region
    _
  $region5: #{batch_program_classifier_forward.3} parent=0 // pred_fallthru
    _
  // Predicated region
  $region6: #{batch_program_classifier_forward.3} parent=0 // pred_check
    _
  $region7: #{batch_program_classifier_forward.3} parent=0 // pred_check_branch
    %17 = sbr.rel (0) target = $region9
  $region8: #{batch_program_classifier_forward.3} parent=0 // pred_region
    _
  $region9: #{batch_program_classifier_forward.3} parent=0 // pred_fallthru
    _
  // Predicated region
  $region10: #{batch_program_classifier_forward.3} parent=0 // pred_check
    _
  $region11: #{batch_program_classifier_forward.3} parent=0 // pred_check_branch
    %19 = sbr.rel (0) target = $region13
  $region12: #{batch_program_classifier_forward.3} parent=0 // pred_region
    _
  $region13: #{batch_program_classifier_forward.3} parent=0 // pred_fallthru
    _
  // Predicated region
  $region14: #{batch_program_classifier_forward.3} parent=0 // pred_check
    _
  $region15: #{batch_program_classifier_forward.3} parent=0 // pred_check_branch
    %21 = sbr.rel (0) target = $region17
  $region16: #{batch_program_classifier_forward.3} parent=0 // pred_region
    _
  $region17: #{batch_program_classifier_forward.3} parent=0 // pred_fallthru
    _
  // Predicated region
  $region18: #{batch_program_classifier_forward.3} parent=0 // pred_check
    _
  $region19: #{batch_program_classifier_forward.3} parent=0 // pred_check_branch
    %23 = sbr.rel (0) target = $region21
  $region20: #{batch_program_classifier_forward.3} parent=0 // pred_region
    _
  $region21: #{batch_program_classifier_forward.3} parent=0 // pred_fallthru
    _
  // Predicated region
  $region22: #{batch_program_classifier_forward.3} parent=0 // pred_check
    _
  $region23: #{batch_program_classifier_forward.3} parent=0 // pred_check_branch
    %25 = sbr.rel (0) target = $region25
  $region24: #{batch_program_classifier_forward.3} parent=0 // pred_region
    _
  $region25: #{batch_program_classifier_forward.3} parent=0 // pred_fallthru
    _
  // Predicated region
  $region26: #{batch_program_classifier_forward.3} parent=0 // pred_check
    _
  $region27: #{batch_program_classifier_forward.3} parent=0 // pred_check_branch
    %27 = sbr.rel (0) target = $region29
  $region28: #{batch_program_classifier_forward.3} parent=0 // pred_region
    _
  $region29: #{batch_program_classifier_forward.3} parent=0 // pred_fallthru
    _
  %v29 = vld [vmem:[%s0] sm:$0xf]
  %v30 = vld [vmem:[%s0 + $0x4] sm:$0xf]
  %v31 = vld [vmem:[%s0 + $0x8] sm:$0xf]
  %v32 = vld [vmem:[%s0 + $0xc] sm:$0xf]
  %v33 = vld [vmem:[%s0 + $0x10] sm:$0xf]
  %v34 = vld [vmem:[%s0 + $0x14] sm:$0xf]
  %v35 = vld [vmem:[%s0 + $0x18] sm:$0xf]
  %v36 = vld [vmem:[%s0 + $0x1c] sm:$0xf]
  %v37 = vld [vmem:[%s0 + $0x20] sm:$0xf]
  %v38 = vld [vmem:[%s0 + $0x24] sm:$0xf]
  %v39 = vld [vmem:[%s0 + $0x28] sm:$0xf]
  %v40 = vld [vmem:[%s0 + $0x2c] sm:$0xf]
  %v41 = vld [vmem:[%s0 + $0x30] sm:$0xf]
  %v42 = vld [vmem:[%s0 + $0x34] sm:$0xf]
  %v43 = vld [vmem:[%s0 + $0x38] sm:$0xf]
  %v44 = vld [vmem:[%s0 + $0x3c] sm:$0xf]
  %v45 = vld [vmem:[%s0 + $0x40] sm:$0xf]
  %v46 = vld [vmem:[%s0 + $0x44] sm:$0xf]
  %v47 = vld [vmem:[%s0 + $0x48] sm:$0xf]
  %v48 = vld [vmem:[%s0 + $0x4c] sm:$0xf]
  %v49 = vld [vmem:[%s0 + $0x50] sm:$0xf]
  %v50 = vld [vmem:[%s0 + $0x54] sm:$0xf]
  %v51 = vld [vmem:[%s0 + $0x58] sm:$0xf]
  %v52 = vld [vmem:[%s0 + $0x5c] sm:$0xf]
  %v53 = vld [vmem:[%s0 + $0x60] sm:$0xf]
  %v54 = vld [vmem:[%s0 + $0x64] sm:$0xf]
  %v55 = vld [vmem:[%s0 + $0x68] sm:$0xf]
  %v56 = vld [vmem:[%s0 + $0x6c] sm:$0xf]
  %v57 = vld [vmem:[%s0 + $0x70] sm:$0xf]
  %v58 = vld [vmem:[%s0 + $0x74] sm:$0xf]
  %v59 = vld [vmem:[%s0 + $0x78] sm:$0xf]
  %v60 = vld [vmem:[%s0 + $0x7c] sm:$0xf]
  %v61 = vld [vmem:[%s3] sm:$0xf]
  %v62 = vld [vmem:[%s3 + $0x4] sm:$0xf]
  %v63 = vld [vmem:[%s4] sm:$0x1]
  %v65 = vlaneseq
  %v66 = vshrl.u32 %v65, 7
  %v67 = vsub.s32 0, %v66
  %v68 = vrot.slane %v63, %v67
  %v102 = vunpack.c.l.b16 %v29
  %v103 = vunpack.c.l.b16 %v30
  %v104 = vunpack.c.l.b16 %v31
  %v105 = vunpack.c.l.b16 %v32
  %v106 = vunpack.c.l.b16 %v33
  %v107 = vunpack.c.l.b16 %v34
  %v108 = vunpack.c.l.b16 %v35
  %v109 = vunpack.c.l.b16 %v36
  %v110 = vunpack.c.l.b16 %v37
  %v111 = vunpack.c.l.b16 %v38
  %v112 = vunpack.c.l.b16 %v39
  %v113 = vunpack.c.l.b16 %v40
  %v114 = vunpack.c.l.b16 %v41
  %v115 = vunpack.c.l.b16 %v42
  %v116 = vunpack.c.l.b16 %v43
  %v117 = vunpack.c.l.b16 %v44
  %v118 = vunpack.c.l.b16 %v45
  %v119 = vunpack.c.l.b16 %v46
  %v120 = vunpack.c.l.b16 %v47
  %v121 = vunpack.c.l.b16 %v48
  %v122 = vunpack.c.l.b16 %v49
  %v123 = vunpack.c.l.b16 %v50
  %v124 = vunpack.c.l.b16 %v51
  %v125 = vunpack.c.l.b16 %v52
  %v126 = vunpack.c.l.b16 %v53
  %v127 = vunpack.c.l.b16 %v54
  %v128 = vunpack.c.l.b16 %v55
  %v129 = vunpack.c.l.b16 %v56
  %v130 = vunpack.c.l.b16 %v57
  %v131 = vunpack.c.l.b16 %v58
  %v132 = vunpack.c.l.b16 %v59
  %v133 = vunpack.c.l.b16 %v60
  %v134 = vpack.c.b16 %v103, %v102
  %v135 = vpack.c.b16 %v105, %v104
  %v136 = vpack.c.b16 %v107, %v106
  %v137 = vpack.c.b16 %v109, %v108
  %v138 = vpack.c.b16 %v111, %v110
  %v139 = vpack.c.b16 %v113, %v112
  %v140 = vpack.c.b16 %v115, %v114
  %v141 = vpack.c.b16 %v117, %v116
  %v142 = vpack.c.b16 %v119, %v118
  %v143 = vpack.c.b16 %v121, %v120
  %v144 = vpack.c.b16 %v123, %v122
  %v145 = vpack.c.b16 %v125, %v124
  %v146 = vpack.c.b16 %v127, %v126
  %v147 = vpack.c.b16 %v129, %v128
  %v148 = vpack.c.b16 %v131, %v130
  %v149 = vpack.c.b16 %v133, %v132
  %v152 = vunpack.c.l.b16 %v61
  %v153 = vunpack.c.l.b16 %v62
  %v154 = vpack.c.b16 %v153, %v152
  %vm156 = vcmask 130048
  %v158 = vsel %vm156, %v134, 0
  %v161 = vsel %vm156, %v135, 0
  %v164 = vsel %vm156, %v136, 0
  %v167 = vsel %vm156, %v137, 0
  %v170 = vsel %vm156, %v138, 0
  %v173 = vsel %vm156, %v139, 0
  %v176 = vsel %vm156, %v140, 0
  %v179 = vsel %vm156, %v141, 0
  %v182 = vsel %vm156, %v142, 0
  %v185 = vsel %vm156, %v143, 0
  %v188 = vsel %vm156, %v144, 0
  %v191 = vsel %vm156, %v145, 0
  %v194 = vsel %vm156, %v146, 0
  %v197 = vsel %vm156, %v147, 0
  %v200 = vsel %vm156, %v148, 0
  %v203 = vsel %vm156, %v149, 0
  %205 = vmatprep.subr.bf16.mxu0 0
  %206 = vmatpush1.bf16.msra.mxu0 %v154
  %207 = vmatprep.subr.bf16.mxu0 0
  %208 = vmatpush1.bf16.msra.mxu0 0
  %209 = vmatprep.subr.bf16.mxu0 0
  %210 = vmatpush1.bf16.msra.mxu0 0
  %211 = vmatprep.subr.bf16.mxu0 0
  %212 = vmatpush1.bf16.msra.mxu0 0
  %213 = vmatprep.subr.bf16.mxu0 0
  %214 = vmatpush1.bf16.msra.mxu0 0
  %215 = vmatprep.subr.bf16.mxu0 0
  %216 = vmatpush1.bf16.msra.mxu0 0
  %217 = vmatprep.subr.bf16.mxu0 0
  %218 = vmatpush1.bf16.msra.mxu0 0
  %219 = vmatprep.subr.bf16.mxu0 0
  %220 = vmatpush1.bf16.msra.mxu0 0
  %221 = vmatprep.subr.bf16.mxu0 0
  %222 = vmatpush1.bf16.msra.mxu0 0
  %223 = vmatprep.subr.bf16.mxu0 0
  %224 = vmatpush1.bf16.msra.mxu0 0
  %225 = vmatprep.subr.bf16.mxu0 0
  %226 = vmatpush1.bf16.msra.mxu0 0
  %227 = vmatprep.subr.bf16.mxu0 0
  %228 = vmatpush1.bf16.msra.mxu0 0
  %229 = vmatprep.subr.bf16.mxu0 0
  %230 = vmatpush1.bf16.msra.mxu0 0
  %231 = vmatprep.subr.bf16.mxu0 0
  %232 = vmatpush1.bf16.msra.mxu0 0
  %233 = vmatprep.subr.bf16.mxu0 0
  %234 = vmatpush1.bf16.msra.mxu0 0
  %235 = vmatprep.subr.bf16.mxu0 0
  %236 = vmatpush1.bf16.msra.mxu0 0
  %237 = vmatprep.mubr.bf16.mxu0 0
  %238 = vmatmul.mubr.bf16.gmra.mrb[0].mxu0 %v158
  %v239 = vpop.f32.mrb[0].mxu0
  %v240 = vadd.f32 %v68, %v239
  %v241 = vpop.f32.mrb[0].mxu0
  %v242 = vpop.f32.mrb[0].mxu0
  %v243 = vadd.f32 %v68, %v242
  %v244 = vpop.f32.mrb[0].mxu0
  %245 = vmatprep.mubr.bf16.mxu0 0
  %246 = vmatmul.mubr.bf16.gmra.mrb[0].mxu0 %v161
  %v247 = vpop.f32.mrb[0].mxu0
  %v248 = vadd.f32 %v68, %v247
  %v249 = vpop.f32.mrb[0].mxu0
  %v250 = vpop.f32.mrb[0].mxu0
  %v251 = vadd.f32 %v68, %v250
  %v252 = vpop.f32.mrb[0].mxu0
  %253 = vmatprep.mubr.bf16.mxu0 0
  %254 = vmatmul.mubr.bf16.gmra.mrb[0].mxu0 %v164
  %v255 = vpop.f32.mrb[0].mxu0
  %v256 = vadd.f32 %v68, %v255
  %v257 = vpop.f32.mrb[0].mxu0
  %v258 = vpop.f32.mrb[0].mxu0
  %v259 = vadd.f32 %v68, %v258
  %v260 = vpop.f32.mrb[0].mxu0
  %261 = vmatprep.mubr.bf16.mxu0 0
  %262 = vmatmul.mubr.bf16.gmra.mrb[0].mxu0 %v167
  %v263 = vpop.f32.mrb[0].mxu0
  %v264 = vadd.f32 %v68, %v263
  %v265 = vpop.f32.mrb[0].mxu0
  %v266 = vpop.f32.mrb[0].mxu0
  %v267 = vadd.f32 %v68, %v266
  %v268 = vpop.f32.mrb[0].mxu0
  %269 = vmatprep.mubr.bf16.mxu0 0
  %270 = vmatmul.mubr.bf16.gmra.mrb[0].mxu0 %v170
  %v271 = vpop.f32.mrb[0].mxu0
  %v272 = vadd.f32 %v68, %v271
  %v273 = vpop.f32.mrb[0].mxu0
  %v274 = vpop.f32.mrb[0].mxu0
  %v275 = vadd.f32 %v68, %v274
  %v276 = vpop.f32.mrb[0].mxu0
  %277 = vmatprep.mubr.bf16.mxu0 0
  %278 = vmatmul.mubr.bf16.gmra.mrb[0].mxu0 %v173
  %v279 = vpop.f32.mrb[0].mxu0
  %v280 = vadd.f32 %v68, %v279
  %v281 = vpop.f32.mrb[0].mxu0
  %v282 = vpop.f32.mrb[0].mxu0
  %v283 = vadd.f32 %v68, %v282
  %v284 = vpop.f32.mrb[0].mxu0
  %285 = vmatprep.mubr.bf16.mxu0 0
  %286 = vmatmul.mubr.bf16.gmra.mrb[0].mxu0 %v176
  %v287 = vpop.f32.mrb[0].mxu0
  %v288 = vadd.f32 %v68, %v287
  %v289 = vpop.f32.mrb[0].mxu0
  %v290 = vpop.f32.mrb[0].mxu0
  %v291 = vadd.f32 %v68, %v290
  %v292 = vpop.f32.mrb[0].mxu0
  %293 = vmatprep.mubr.bf16.mxu0 0
  %294 = vmatmul.mubr.bf16.gmra.mrb[0].mxu0 %v179
  %v295 = vpop.f32.mrb[0].mxu0
  %v296 = vadd.f32 %v68, %v295
  %v297 = vpop.f32.mrb[0].mxu0
  %v298 = vpop.f32.mrb[0].mxu0
  %v299 = vadd.f32 %v68, %v298
  %v300 = vpop.f32.mrb[0].mxu0
  %301 = vmatprep.mubr.bf16.mxu0 0
  %302 = vmatmul.mubr.bf16.gmra.mrb[0].mxu0 %v182
  %v303 = vpop.f32.mrb[0].mxu0
  %v304 = vadd.f32 %v68, %v303
  %v305 = vpop.f32.mrb[0].mxu0
  %v306 = vpop.f32.mrb[0].mxu0
  %v307 = vadd.f32 %v68, %v306
  %v308 = vpop.f32.mrb[0].mxu0
  %309 = vmatprep.mubr.bf16.mxu0 0
  %310 = vmatmul.mubr.bf16.gmra.mrb[0].mxu0 %v185
  %v311 = vpop.f32.mrb[0].mxu0
  %v312 = vadd.f32 %v68, %v311
  %v313 = vpop.f32.mrb[0].mxu0
  %v314 = vpop.f32.mrb[0].mxu0
  %v315 = vadd.f32 %v68, %v314
  %v316 = vpop.f32.mrb[0].mxu0
  %317 = vmatprep.mubr.bf16.mxu0 0
  %318 = vmatmul.mubr.bf16.gmra.mrb[0].mxu0 %v188
  %v319 = vpop.f32.mrb[0].mxu0
  %v320 = vadd.f32 %v68, %v319
  %v321 = vpop.f32.mrb[0].mxu0
  %v322 = vpop.f32.mrb[0].mxu0
  %v323 = vadd.f32 %v68, %v322
  %v324 = vpop.f32.mrb[0].mxu0
  %325 = vmatprep.mubr.bf16.mxu0 0
  %326 = vmatmul.mubr.bf16.gmra.mrb[0].mxu0 %v191
  %v327 = vpop.f32.mrb[0].mxu0
  %v328 = vadd.f32 %v68, %v327
  %v329 = vpop.f32.mrb[0].mxu0
  %v330 = vpop.f32.mrb[0].mxu0
  %v331 = vadd.f32 %v68, %v330
  %v332 = vpop.f32.mrb[0].mxu0
  %333 = vmatprep.mubr.bf16.mxu0 0
  %334 = vmatmul.mubr.bf16.gmra.mrb[0].mxu0 %v194
  %v335 = vpop.f32.mrb[0].mxu0
  %v336 = vadd.f32 %v68, %v335
  %v337 = vpop.f32.mrb[0].mxu0
  %v338 = vpop.f32.mrb[0].mxu0
  %v339 = vadd.f32 %v68, %v338
  %v340 = vpop.f32.mrb[0].mxu0
  %341 = vmatprep.mubr.bf16.mxu0 0
  %342 = vmatmul.mubr.bf16.gmra.mrb[0].mxu0 %v197
  %v343 = vpop.f32.mrb[0].mxu0
  %v344 = vadd.f32 %v68, %v343
  %v345 = vpop.f32.mrb[0].mxu0
  %v346 = vpop.f32.mrb[0].mxu0
  %v347 = vadd.f32 %v68, %v346
  %v348 = vpop.f32.mrb[0].mxu0
  %349 = vmatprep.mubr.bf16.mxu0 0
  %350 = vmatmul.mubr.bf16.gmra.mrb[0].mxu0 %v200
  %v351 = vpop.f32.mrb[0].mxu0
  %v352 = vadd.f32 %v68, %v351
  %v353 = vpop.f32.mrb[0].mxu0
  %v354 = vpop.f32.mrb[0].mxu0
  %v355 = vadd.f32 %v68, %v354
  %v356 = vpop.f32.mrb[0].mxu0
  %357 = vmatprep.mubr.bf16.mxu0 0
  %358 = vmatmul.mubr.bf16.gmra.mrb[0].mxu0 %v203
  %v359 = vpop.f32.mrb[0].mxu0
  %v360 = vadd.f32 %v68, %v359
  %v361 = vpop.f32.mrb[0].mxu0
  %v362 = vpop.f32.mrb[0].mxu0
  %v363 = vadd.f32 %v68, %v362
  %v364 = vpop.f32.mrb[0].mxu0
  %365 = vdwg.mxu0
  %v366 = vld [vmem:[%s1] sm:$0xff]
  %v367 = vld [vmem:[%s1 + $0x8] sm:$0xff]
  %v368 = vld [vmem:[%s1 + $0x10] sm:$0xff]
  %v369 = vld [vmem:[%s1 + $0x18] sm:$0xff]
  %v370 = vld [vmem:[%s1 + $0x20] sm:$0xff]
  %v371 = vld [vmem:[%s1 + $0x28] sm:$0xff]
  %v372 = vld [vmem:[%s1 + $0x30] sm:$0xff]
  %v373 = vld [vmem:[%s1 + $0x38] sm:$0xff]
  %v374 = vld [vmem:[%s1 + $0x40] sm:$0xff]
  %v375 = vld [vmem:[%s1 + $0x48] sm:$0xff]
  %v376 = vld [vmem:[%s1 + $0x50] sm:$0xff]
  %v377 = vld [vmem:[%s1 + $0x58] sm:$0xff]
  %v378 = vld [vmem:[%s1 + $0x60] sm:$0xff]
  %v379 = vld [vmem:[%s1 + $0x68] sm:$0xff]
  %v380 = vld [vmem:[%s1 + $0x70] sm:$0xff]
  %v381 = vld [vmem:[%s1 + $0x78] sm:$0xff]
  %v382 = vld [vmem:[%s1 + $0x80] sm:$0xff]
  %v383 = vld [vmem:[%s1 + $0x88] sm:$0xff]
  %v384 = vld [vmem:[%s1 + $0x90] sm:$0xff]
  %v385 = vld [vmem:[%s1 + $0x98] sm:$0xff]
  %v386 = vld [vmem:[%s1 + $0xa0] sm:$0xff]
  %v387 = vld [vmem:[%s1 + $0xa8] sm:$0xff]
  %v388 = vld [vmem:[%s1 + $0xb0] sm:$0xff]
  %v389 = vld [vmem:[%s1 + $0xb8] sm:$0xff]
  %v390 = vld [vmem:[%s1 + $0xc0] sm:$0xff]
  %v391 = vld [vmem:[%s1 + $0xc8] sm:$0xff]
  %v392 = vld [vmem:[%s1 + $0xd0] sm:$0xff]
  %v393 = vld [vmem:[%s1 + $0xd8] sm:$0xff]
  %v394 = vld [vmem:[%s1 + $0xe0] sm:$0xff]
  %v395 = vld [vmem:[%s1 + $0xe8] sm:$0xff]
  %v396 = vld [vmem:[%s1 + $0xf0] sm:$0xff]
  %v397 = vld [vmem:[%s1 + $0xf8] sm:$0xff]
  %vm398 = vcmp.gt.f32.partialorder %v366, 0.0
  %vm399 = vcmp.gt.f32.partialorder %v367, 0.0
  %vm400 = vcmp.gt.f32.partialorder %v368, 0.0
  %vm401 = vcmp.gt.f32.partialorder %v369, 0.0
  %vm402 = vcmp.gt.f32.partialorder %v370, 0.0
  %vm403 = vcmp.gt.f32.partialorder %v371, 0.0
  %vm404 = vcmp.gt.f32.partialorder %v372, 0.0
  %vm405 = vcmp.gt.f32.partialorder %v373, 0.0
  %vm406 = vcmp.gt.f32.partialorder %v374, 0.0
  %vm407 = vcmp.gt.f32.partialorder %v375, 0.0
  %vm408 = vcmp.gt.f32.partialorder %v376, 0.0
  %vm409 = vcmp.gt.f32.partialorder %v377, 0.0
  %vm410 = vcmp.gt.f32.partialorder %v378, 0.0
  %vm411 = vcmp.gt.f32.partialorder %v379, 0.0
  %vm412 = vcmp.gt.f32.partialorder %v380, 0.0
  %vm413 = vcmp.gt.f32.partialorder %v381, 0.0
  %vm414 = vcmp.gt.f32.partialorder %v382, 0.0
  %vm415 = vcmp.gt.f32.partialorder %v383, 0.0
  %vm416 = vcmp.gt.f32.partialorder %v384, 0.0
  %vm417 = vcmp.gt.f32.partialorder %v385, 0.0
  %vm418 = vcmp.gt.f32.partialorder %v386, 0.0
  %vm419 = vcmp.gt.f32.partialorder %v387, 0.0
  %vm420 = vcmp.gt.f32.partialorder %v388, 0.0
  %vm421 = vcmp.gt.f32.partialorder %v389, 0.0
  %vm422 = vcmp.gt.f32.partialorder %v390, 0.0
  %vm423 = vcmp.gt.f32.partialorder %v391, 0.0
  %vm424 = vcmp.gt.f32.partialorder %v392, 0.0
  %vm425 = vcmp.gt.f32.partialorder %v393, 0.0
  %vm426 = vcmp.gt.f32.partialorder %v394, 0.0
  %vm427 = vcmp.gt.f32.partialorder %v395, 0.0
  %vm428 = vcmp.gt.f32.partialorder %v396, 0.0
  %vm429 = vcmp.gt.f32.partialorder %v397, 0.0
  %v430 = vsel %vm398, 1, 0
  %v431 = vsel %vm399, 1, 0
  %v432 = vsel %vm400, 1, 0
  %v433 = vsel %vm401, 1, 0
  %v434 = vsel %vm402, 1, 0
  %v435 = vsel %vm403, 1, 0
  %v436 = vsel %vm404, 1, 0
  %v437 = vsel %vm405, 1, 0
  %v438 = vsel %vm406, 1, 0
  %v439 = vsel %vm407, 1, 0
  %v440 = vsel %vm408, 1, 0
  %v441 = vsel %vm409, 1, 0
  %v442 = vsel %vm410, 1, 0
  %v443 = vsel %vm411, 1, 0
  %v444 = vsel %vm412, 1, 0
  %v445 = vsel %vm413, 1, 0
  %v446 = vsel %vm414, 1, 0
  %v447 = vsel %vm415, 1, 0
  %v448 = vsel %vm416, 1, 0
  %v449 = vsel %vm417, 1, 0
  %v450 = vsel %vm418, 1, 0
  %v451 = vsel %vm419, 1, 0
  %v452 = vsel %vm420, 1, 0
  %v453 = vsel %vm421, 1, 0
  %v454 = vsel %vm422, 1, 0
  %v455 = vsel %vm423, 1, 0
  %v456 = vsel %vm424, 1, 0
  %v457 = vsel %vm425, 1, 0
  %v458 = vsel %vm426, 1, 0
  %v459 = vsel %vm427, 1, 0
  %v460 = vsel %vm428, 1, 0
  %v461 = vsel %vm429, 1, 0
  %462 = vset.pattern.permute.xlu0 0
  %463 = vperm.xlu0 %462, %v430
  %v464 = vpop.permute.xlu0 %463
  %465 = vset.pattern.permute.xlu0 0
  %466 = vperm.xlu0 %465, %v431
  %v467 = vpop.permute.xlu0 %466
  %468 = vset.pattern.permute.xlu0 0
  %469 = vperm.xlu0 %468, %v432
  %v470 = vpop.permute.xlu0 %469
  %471 = vset.pattern.permute.xlu0 0
  %472 = vperm.xlu0 %471, %v433
  %v473 = vpop.permute.xlu0 %472
  %474 = vset.pattern.permute.xlu0 0
  %475 = vperm.xlu0 %474, %v434
  %v476 = vpop.permute.xlu0 %475
  %477 = vset.pattern.permute.xlu0 0
  %478 = vperm.xlu0 %477, %v435
  %v479 = vpop.permute.xlu0 %478
  %480 = vset.pattern.permute.xlu0 0
  %481 = vperm.xlu0 %480, %v436
  %v482 = vpop.permute.xlu0 %481
  %483 = vset.pattern.permute.xlu0 0
  %484 = vperm.xlu0 %483, %v437
  %v485 = vpop.permute.xlu0 %484
  %486 = vset.pattern.permute.xlu0 0
  %487 = vperm.xlu0 %486, %v438
  %v488 = vpop.permute.xlu0 %487
  %489 = vset.pattern.permute.xlu0 0
  %490 = vperm.xlu0 %489, %v439
  %v491 = vpop.permute.xlu0 %490
  %492 = vset.pattern.permute.xlu0 0
  %493 = vperm.xlu0 %492, %v440
  %v494 = vpop.permute.xlu0 %493
  %495 = vset.pattern.permute.xlu0 0
  %496 = vperm.xlu0 %495, %v441
  %v497 = vpop.permute.xlu0 %496
  %498 = vset.pattern.permute.xlu0 0
  %499 = vperm.xlu0 %498, %v442
  %v500 = vpop.permute.xlu0 %499
  %501 = vset.pattern.permute.xlu0 0
  %502 = vperm.xlu0 %501, %v443
  %v503 = vpop.permute.xlu0 %502
  %504 = vset.pattern.permute.xlu0 0
  %505 = vperm.xlu0 %504, %v444
  %v506 = vpop.permute.xlu0 %505
  %507 = vset.pattern.permute.xlu0 0
  %508 = vperm.xlu0 %507, %v445
  %v509 = vpop.permute.xlu0 %508
  %510 = vset.pattern.permute.xlu0 0
  %511 = vperm.xlu0 %510, %v446
  %v512 = vpop.permute.xlu0 %511
  %513 = vset.pattern.permute.xlu0 0
  %514 = vperm.xlu0 %513, %v447
  %v515 = vpop.permute.xlu0 %514
  %516 = vset.pattern.permute.xlu0 0
  %517 = vperm.xlu0 %516, %v448
  %v518 = vpop.permute.xlu0 %517
  %519 = vset.pattern.permute.xlu0 0
  %520 = vperm.xlu0 %519, %v449
  %v521 = vpop.permute.xlu0 %520
  %522 = vset.pattern.permute.xlu0 0
  %523 = vperm.xlu0 %522, %v450
  %v524 = vpop.permute.xlu0 %523
  %525 = vset.pattern.permute.xlu0 0
  %526 = vperm.xlu0 %525, %v451
  %v527 = vpop.permute.xlu0 %526
  %528 = vset.pattern.permute.xlu0 0
  %529 = vperm.xlu0 %528, %v452
  %v530 = vpop.permute.xlu0 %529
  %531 = vset.pattern.permute.xlu0 0
  %532 = vperm.xlu0 %531, %v453
  %v533 = vpop.permute.xlu0 %532
  %534 = vset.pattern.permute.xlu0 0
  %535 = vperm.xlu0 %534, %v454
  %v536 = vpop.permute.xlu0 %535
  %537 = vset.pattern.permute.xlu0 0
  %538 = vperm.xlu0 %537, %v455
  %v539 = vpop.permute.xlu0 %538
  %540 = vset.pattern.permute.xlu0 0
  %541 = vperm.xlu0 %540, %v456
  %v542 = vpop.permute.xlu0 %541
  %543 = vset.pattern.permute.xlu0 0
  %544 = vperm.xlu0 %543, %v457
  %v545 = vpop.permute.xlu0 %544
  %546 = vset.pattern.permute.xlu0 0
  %547 = vperm.xlu0 %546, %v458
  %v548 = vpop.permute.xlu0 %547
  %549 = vset.pattern.permute.xlu0 0
  %550 = vperm.xlu0 %549, %v459
  %v551 = vpop.permute.xlu0 %550
  %552 = vset.pattern.permute.xlu0 0
  %553 = vperm.xlu0 %552, %v460
  %v554 = vpop.permute.xlu0 %553
  %555 = vset.pattern.permute.xlu0 0
  %556 = vperm.xlu0 %555, %v461
  %v557 = vpop.permute.xlu0 %556
  %vm558 = vcmp.eq.s32.totalorder %v464, 1
  %vm559 = vcmp.eq.s32.totalorder %v467, 1
  %vm560 = vcmp.eq.s32.totalorder %v470, 1
  %vm561 = vcmp.eq.s32.totalorder %v473, 1
  %vm562 = vcmp.eq.s32.totalorder %v476, 1
  %vm563 = vcmp.eq.s32.totalorder %v479, 1
  %vm564 = vcmp.eq.s32.totalorder %v482, 1
  %vm565 = vcmp.eq.s32.totalorder %v485, 1
  %vm566 = vcmp.eq.s32.totalorder %v488, 1
  %vm567 = vcmp.eq.s32.totalorder %v491, 1
  %vm568 = vcmp.eq.s32.totalorder %v494, 1
  %vm569 = vcmp.eq.s32.totalorder %v497, 1
  %vm570 = vcmp.eq.s32.totalorder %v500, 1
  %vm571 = vcmp.eq.s32.totalorder %v503, 1
  %vm572 = vcmp.eq.s32.totalorder %v506, 1
  %vm573 = vcmp.eq.s32.totalorder %v509, 1
  %vm574 = vcmp.eq.s32.totalorder %v512, 1
  %vm575 = vcmp.eq.s32.totalorder %v515, 1
  %vm576 = vcmp.eq.s32.totalorder %v518, 1
  %vm577 = vcmp.eq.s32.totalorder %v521, 1
  %vm578 = vcmp.eq.s32.totalorder %v524, 1
  %vm579 = vcmp.eq.s32.totalorder %v527, 1
  %vm580 = vcmp.eq.s32.totalorder %v530, 1
  %vm581 = vcmp.eq.s32.totalorder %v533, 1
  %vm582 = vcmp.eq.s32.totalorder %v536, 1
  %vm583 = vcmp.eq.s32.totalorder %v539, 1
  %vm584 = vcmp.eq.s32.totalorder %v542, 1
  %vm585 = vcmp.eq.s32.totalorder %v545, 1
  %vm586 = vcmp.eq.s32.totalorder %v548, 1
  %vm587 = vcmp.eq.s32.totalorder %v551, 1
  %vm588 = vcmp.eq.s32.totalorder %v554, 1
  %vm589 = vcmp.eq.s32.totalorder %v557, 1
  %v590 = vsel %vm558, %v240, -1e+30
  %v591 = vsel %vm559, %v243, -1e+30
  %v592 = vsel %vm560, %v248, -1e+30
  %v593 = vsel %vm561, %v251, -1e+30
  %v594 = vsel %vm562, %v256, -1e+30
  %v595 = vsel %vm563, %v259, -1e+30
  %v596 = vsel %vm564, %v264, -1e+30
  %v597 = vsel %vm565, %v267, -1e+30
  %v598 = vsel %vm566, %v272, -1e+30
  %v599 = vsel %vm567, %v275, -1e+30
  %v600 = vsel %vm568, %v280, -1e+30
  %v601 = vsel %vm569, %v283, -1e+30
  %v602 = vsel %vm570, %v288, -1e+30
  %v603 = vsel %vm571, %v291, -1e+30
  %v604 = vsel %vm572, %v296, -1e+30
  %v605 = vsel %vm573, %v299, -1e+30
  %v606 = vsel %vm574, %v304, -1e+30
  %v607 = vsel %vm575, %v307, -1e+30
  %v608 = vsel %vm576, %v312, -1e+30
  %v609 = vsel %vm577, %v315, -1e+30
  %v610 = vsel %vm578, %v320, -1e+30
  %v611 = vsel %vm579, %v323, -1e+30
  %v612 = vsel %vm580, %v328, -1e+30
  %v613 = vsel %vm581, %v331, -1e+30
  %v614 = vsel %vm582, %v336, -1e+30
  %v615 = vsel %vm583, %v339, -1e+30
  %v616 = vsel %vm584, %v344, -1e+30
  %v617 = vsel %vm585, %v347, -1e+30
  %v618 = vsel %vm586, %v352, -1e+30
  %v619 = vsel %vm587, %v355, -1e+30
  %v620 = vsel %vm588, %v360, -1e+30
  %v621 = vsel %vm589, %v363, -1e+30
  %vm622 = vcmask 261120
  %v623 = vsel %vm622, %v590, -inf
  %v624 = vrot.slane %v623, 4
  %v625 = vmax.f32 %v623, %v624
  %v626 = vrot.slane %v625, 2
  %v627 = vmax.f32 %v625, %v626
  %v628 = vrot.slane %v627, 1
  %v629 = vmax.f32 %v627, %v628
  %v630 = vsel %vm622, %v591, -inf
  %v631 = vrot.slane %v630, 4
  %v632 = vmax.f32 %v630, %v631
  %v633 = vrot.slane %v632, 2
  %v634 = vmax.f32 %v632, %v633
  %v635 = vrot.slane %v634, 1
  %v636 = vmax.f32 %v634, %v635
  %v637 = vsel %vm622, %v592, -inf
  %v638 = vrot.slane %v637, 4
  %v639 = vmax.f32 %v637, %v638
  %v640 = vrot.slane %v639, 2
  %v641 = vmax.f32 %v639, %v640
  %v642 = vrot.slane %v641, 1
  %v643 = vmax.f32 %v641, %v642
  %v644 = vsel %vm622, %v593, -inf
  %v645 = vrot.slane %v644, 4
  %v646 = vmax.f32 %v644, %v645
  %v647 = vrot.slane %v646, 2
  %v648 = vmax.f32 %v646, %v647
  %v649 = vrot.slane %v648, 1
  %v650 = vmax.f32 %v648, %v649
  %v651 = vsel %vm622, %v594, -inf
  %v652 = vrot.slane %v651, 4
  %v653 = vmax.f32 %v651, %v652
  %v654 = vrot.slane %v653, 2
  %v655 = vmax.f32 %v653, %v654
  %v656 = vrot.slane %v655, 1
  %v657 = vmax.f32 %v655, %v656
  %v658 = vsel %vm622, %v595, -inf
  %v659 = vrot.slane %v658, 4
  %v660 = vmax.f32 %v658, %v659
  %v661 = vrot.slane %v660, 2
  %v662 = vmax.f32 %v660, %v661
  %v663 = vrot.slane %v662, 1
  %v664 = vmax.f32 %v662, %v663
  %v665 = vsel %vm622, %v596, -inf
  %v666 = vrot.slane %v665, 4
  %v667 = vmax.f32 %v665, %v666
  %v668 = vrot.slane %v667, 2
  %v669 = vmax.f32 %v667, %v668
  %v670 = vrot.slane %v669, 1
  %v671 = vmax.f32 %v669, %v670
  %v672 = vsel %vm622, %v597, -inf
  %v673 = vrot.slane %v672, 4
  %v674 = vmax.f32 %v672, %v673
  %v675 = vrot.slane %v674, 2
  %v676 = vmax.f32 %v674, %v675
  %v677 = vrot.slane %v676, 1
  %v678 = vmax.f32 %v676, %v677
  %v679 = vsel %vm622, %v598, -inf
  %v680 = vrot.slane %v679, 4
  %v681 = vmax.f32 %v679, %v680
  %v682 = vrot.slane %v681, 2
  %v683 = vmax.f32 %v681, %v682
  %v684 = vrot.slane %v683, 1
  %v685 = vmax.f32 %v683, %v684
  %v686 = vsel %vm622, %v599, -inf
  %v687 = vrot.slane %v686, 4
  %v688 = vmax.f32 %v686, %v687
  %v689 = vrot.slane %v688, 2
  %v690 = vmax.f32 %v688, %v689
  %v691 = vrot.slane %v690, 1
  %v692 = vmax.f32 %v690, %v691
  %v693 = vsel %vm622, %v600, -inf
  %v694 = vrot.slane %v693, 4
  %v695 = vmax.f32 %v693, %v694
  %v696 = vrot.slane %v695, 2
  %v697 = vmax.f32 %v695, %v696
  %v698 = vrot.slane %v697, 1
  %v699 = vmax.f32 %v697, %v698
  %v700 = vsel %vm622, %v601, -inf
  %v701 = vrot.slane %v700, 4
  %v702 = vmax.f32 %v700, %v701
  %v703 = vrot.slane %v702, 2
  %v704 = vmax.f32 %v702, %v703
  %v705 = vrot.slane %v704, 1
  %v706 = vmax.f32 %v704, %v705
  %v707 = vsel %vm622, %v602, -inf
  %v708 = vrot.slane %v707, 4
  %v709 = vmax.f32 %v707, %v708
  %v710 = vrot.slane %v709, 2
  %v711 = vmax.f32 %v709, %v710
  %v712 = vrot.slane %v711, 1
  %v713 = vmax.f32 %v711, %v712
  %v714 = vsel %vm622, %v603, -inf
  %v715 = vrot.slane %v714, 4
  %v716 = vmax.f32 %v714, %v715
  %v717 = vrot.slane %v716, 2
  %v718 = vmax.f32 %v716, %v717
  %v719 = vrot.slane %v718, 1
  %v720 = vmax.f32 %v718, %v719
  %v721 = vsel %vm622, %v604, -inf
  %v722 = vrot.slane %v721, 4
  %v723 = vmax.f32 %v721, %v722
  %v724 = vrot.slane %v723, 2
  %v725 = vmax.f32 %v723, %v724
  %v726 = vrot.slane %v725, 1
  %v727 = vmax.f32 %v725, %v726
  %v728 = vsel %vm622, %v605, -inf
  %v729 = vrot.slane %v728, 4
  %v730 = vmax.f32 %v728, %v729
  %v731 = vrot.slane %v730, 2
  %v732 = vmax.f32 %v730, %v731
  %v733 = vrot.slane %v732, 1
  %v734 = vmax.f32 %v732, %v733
  %v735 = vsel %vm622, %v606, -inf
  %v736 = vrot.slane %v735, 4
  %v737 = vmax.f32 %v735, %v736
  %v738 = vrot.slane %v737, 2
  %v739 = vmax.f32 %v737, %v738
  %v740 = vrot.slane %v739, 1
  %v741 = vmax.f32 %v739, %v740
  %v742 = vsel %vm622, %v607, -inf
  %v743 = vrot.slane %v742, 4
  %v744 = vmax.f32 %v742, %v743
  %v745 = vrot.slane %v744, 2
  %v746 = vmax.f32 %v744, %v745
  %v747 = vrot.slane %v746, 1
  %v748 = vmax.f32 %v746, %v747
  %v749 = vsel %vm622, %v608, -inf
  %v750 = vrot.slane %v749, 4
  %v751 = vmax.f32 %v749, %v750
  %v752 = vrot.slane %v751, 2
  %v753 = vmax.f32 %v751, %v752
  %v754 = vrot.slane %v753, 1
  %v755 = vmax.f32 %v753, %v754
  %v756 = vsel %vm622, %v609, -inf
  %v757 = vrot.slane %v756, 4
  %v758 = vmax.f32 %v756, %v757
  %v759 = vrot.slane %v758, 2
  %v760 = vmax.f32 %v758, %v759
  %v761 = vrot.slane %v760, 1
  %v762 = vmax.f32 %v760, %v761
  %v763 = vsel %vm622, %v610, -inf
  %v764 = vrot.slane %v763, 4
  %v765 = vmax.f32 %v763, %v764
  %v766 = vrot.slane %v765, 2
  %v767 = vmax.f32 %v765, %v766
  %v768 = vrot.slane %v767, 1
  %v769 = vmax.f32 %v767, %v768
  %v770 = vsel %vm622, %v611, -inf
  %v771 = vrot.slane %v770, 4
  %v772 = vmax.f32 %v770, %v771
  %v773 = vrot.slane %v772, 2
  %v774 = vmax.f32 %v772, %v773
  %v775 = vrot.slane %v774, 1
  %v776 = vmax.f32 %v774, %v775
  %v777 = vsel %vm622, %v612, -inf
  %v778 = vrot.slane %v777, 4
  %v779 = vmax.f32 %v777, %v778
  %v780 = vrot.slane %v779, 2
  %v781 = vmax.f32 %v779, %v780
  %v782 = vrot.slane %v781, 1
  %v783 = vmax.f32 %v781, %v782
  %v784 = vsel %vm622, %v613, -inf
  %v785 = vrot.slane %v784, 4
  %v786 = vmax.f32 %v784, %v785
  %v787 = vrot.slane %v786, 2
  %v788 = vmax.f32 %v786, %v787
  %v789 = vrot.slane %v788, 1
  %v790 = vmax.f32 %v788, %v789
  %v791 = vsel %vm622, %v614, -inf
  %v792 = vrot.slane %v791, 4
  %v793 = vmax.f32 %v791, %v792
  %v794 = vrot.slane %v793, 2
  %v795 = vmax.f32 %v793, %v794
  %v796 = vrot.slane %v795, 1
  %v797 = vmax.f32 %v795, %v796
  %v798 = vsel %vm622, %v615, -inf
  %v799 = vrot.slane %v798, 4
  %v800 = vmax.f32 %v798, %v799
  %v801 = vrot.slane %v800, 2
  %v802 = vmax.f32 %v800, %v801
  %v803 = vrot.slane %v802, 1
  %v804 = vmax.f32 %v802, %v803
  %v805 = vsel %vm622, %v616, -inf
  %v806 = vrot.slane %v805, 4
  %v807 = vmax.f32 %v805, %v806
  %v808 = vrot.slane %v807, 2
  %v809 = vmax.f32 %v807, %v808
  %v810 = vrot.slane %v809, 1
  %v811 = vmax.f32 %v809, %v810
  %v812 = vsel %vm622, %v617, -inf
  %v813 = vrot.slane %v812, 4
  %v814 = vmax.f32 %v812, %v813
  %v815 = vrot.slane %v814, 2
  %v816 = vmax.f32 %v814, %v815
  %v817 = vrot.slane %v816, 1
  %v818 = vmax.f32 %v816, %v817
  %v819 = vsel %vm622, %v618, -inf
  %v820 = vrot.slane %v819, 4
  %v821 = vmax.f32 %v819, %v820
  %v822 = vrot.slane %v821, 2
  %v823 = vmax.f32 %v821, %v822
  %v824 = vrot.slane %v823, 1
  %v825 = vmax.f32 %v823, %v824
  %v826 = vsel %vm622, %v619, -inf
  %v827 = vrot.slane %v826, 4
  %v828 = vmax.f32 %v826, %v827
  %v829 = vrot.slane %v828, 2
  %v830 = vmax.f32 %v828, %v829
  %v831 = vrot.slane %v830, 1
  %v832 = vmax.f32 %v830, %v831
  %v833 = vsel %vm622, %v620, -inf
  %v834 = vrot.slane %v833, 4
  %v835 = vmax.f32 %v833, %v834
  %v836 = vrot.slane %v835, 2
  %v837 = vmax.f32 %v835, %v836
  %v838 = vrot.slane %v837, 1
  %v839 = vmax.f32 %v837, %v838
  %v840 = vsel %vm622, %v621, -inf
  %v841 = vrot.slane %v840, 4
  %v842 = vmax.f32 %v840, %v841
  %v843 = vrot.slane %v842, 2
  %v844 = vmax.f32 %v842, %v843
  %v845 = vrot.slane %v844, 1
  %v846 = vmax.f32 %v844, %v845
  %vm847 = vcmask 7168
  %v848 = vsel %vm847, %v366, -inf
  %v849 = vrot.slane %v848, 4
  %v850 = vmax.f32 %v848, %v849
  %v851 = vrot.slane %v850, 2
  %v852 = vmax.f32 %v850, %v851
  %v853 = vrot.slane %v852, 1
  %v854 = vmax.f32 %v852, %v853
  %v855 = vsel %vm847, %v367, -inf
  %v856 = vrot.slane %v855, 4
  %v857 = vmax.f32 %v855, %v856
  %v858 = vrot.slane %v857, 2
  %v859 = vmax.f32 %v857, %v858
  %v860 = vrot.slane %v859, 1
  %v861 = vmax.f32 %v859, %v860
  %v862 = vsel %vm847, %v368, -inf
  %v863 = vrot.slane %v862, 4
  %v864 = vmax.f32 %v862, %v863
  %v865 = vrot.slane %v864, 2
  %v866 = vmax.f32 %v864, %v865
  %v867 = vrot.slane %v866, 1
  %v868 = vmax.f32 %v866, %v867
  %v869 = vsel %vm847, %v369, -inf
  %v870 = vrot.slane %v869, 4
  %v871 = vmax.f32 %v869, %v870
  %v872 = vrot.slane %v871, 2
  %v873 = vmax.f32 %v871, %v872
  %v874 = vrot.slane %v873, 1
  %v875 = vmax.f32 %v873, %v874
  %v876 = vsel %vm847, %v370, -inf
  %v877 = vrot.slane %v876, 4
  %v878 = vmax.f32 %v876, %v877
  %v879 = vrot.slane %v878, 2
  %v880 = vmax.f32 %v878, %v879
  %v881 = vrot.slane %v880, 1
  %v882 = vmax.f32 %v880, %v881
  %v883 = vsel %vm847, %v371, -inf
  %v884 = vrot.slane %v883, 4
  %v885 = vmax.f32 %v883, %v884
  %v886 = vrot.slane %v885, 2
  %v887 = vmax.f32 %v885, %v886
  %v888 = vrot.slane %v887, 1
  %v889 = vmax.f32 %v887, %v888
  %v890 = vsel %vm847, %v372, -inf
  %v891 = vrot.slane %v890, 4
  %v892 = vmax.f32 %v890, %v891
  %v893 = vrot.slane %v892, 2
  %v894 = vmax.f32 %v892, %v893
  %v895 = vrot.slane %v894, 1
  %v896 = vmax.f32 %v894, %v895
  %v897 = vsel %vm847, %v373, -inf
  %v898 = vrot.slane %v897, 4
  %v899 = vmax.f32 %v897, %v898
  %v900 = vrot.slane %v899, 2
  %v901 = vmax.f32 %v899, %v900
  %v902 = vrot.slane %v901, 1
  %v903 = vmax.f32 %v901, %v902
  %v904 = vsel %vm847, %v374, -inf
  %v905 = vrot.slane %v904, 4
  %v906 = vmax.f32 %v904, %v905
  %v907 = vrot.slane %v906, 2
  %v908 = vmax.f32 %v906, %v907
  %v909 = vrot.slane %v908, 1
  %v910 = vmax.f32 %v908, %v909
  %v911 = vsel %vm847, %v375, -inf
  %v912 = vrot.slane %v911, 4
  %v913 = vmax.f32 %v911, %v912
  %v914 = vrot.slane %v913, 2
  %v915 = vmax.f32 %v913, %v914
  %v916 = vrot.slane %v915, 1
  %v917 = vmax.f32 %v915, %v916
  %v918 = vsel %vm847, %v376, -inf
  %v919 = vrot.slane %v918, 4
  %v920 = vmax.f32 %v918, %v919
  %v921 = vrot.slane %v920, 2
  %v922 = vmax.f32 %v920, %v921
  %v923 = vrot.slane %v922, 1
  %v924 = vmax.f32 %v922, %v923
  %v925 = vsel %vm847, %v377, -inf
  %v926 = vrot.slane %v925, 4
  %v927 = vmax.f32 %v925, %v926
  %v928 = vrot.slane %v927, 2
  %v929 = vmax.f32 %v927, %v928
  %v930 = vrot.slane %v929, 1
  %v931 = vmax.f32 %v929, %v930
  %v932 = vsel %vm847, %v378, -inf
  %v933 = vrot.slane %v932, 4
  %v934 = vmax.f32 %v932, %v933
  %v935 = vrot.slane %v934, 2
  %v936 = vmax.f32 %v934, %v935
  %v937 = vrot.slane %v936, 1
  %v938 = vmax.f32 %v936, %v937
  %v939 = vsel %vm847, %v379, -inf
  %v940 = vrot.slane %v939, 4
  %v941 = vmax.f32 %v939, %v940
  %v942 = vrot.slane %v941, 2
  %v943 = vmax.f32 %v941, %v942
  %v944 = vrot.slane %v943, 1
  %v945 = vmax.f32 %v943, %v944
  %v946 = vsel %vm847, %v380, -inf
  %v947 = vrot.slane %v946, 4
  %v948 = vmax.f32 %v946, %v947
  %v949 = vrot.slane %v948, 2
  %v950 = vmax.f32 %v948, %v949
  %v951 = vrot.slane %v950, 1
  %v952 = vmax.f32 %v950, %v951
  %v953 = vsel %vm847, %v381, -inf
  %v954 = vrot.slane %v953, 4
  %v955 = vmax.f32 %v953, %v954
  %v956 = vrot.slane %v955, 2
  %v957 = vmax.f32 %v955, %v956
  %v958 = vrot.slane %v957, 1
  %v959 = vmax.f32 %v957, %v958
  %v960 = vsel %vm847, %v382, -inf
  %v961 = vrot.slane %v960, 4
  %v962 = vmax.f32 %v960, %v961
  %v963 = vrot.slane %v962, 2
  %v964 = vmax.f32 %v962, %v963
  %v965 = vrot.slane %v964, 1
  %v966 = vmax.f32 %v964, %v965
  %v967 = vsel %vm847, %v383, -inf
  %v968 = vrot.slane %v967, 4
  %v969 = vmax.f32 %v967, %v968
  %v970 = vrot.slane %v969, 2
  %v971 = vmax.f32 %v969, %v970
  %v972 = vrot.slane %v971, 1
  %v973 = vmax.f32 %v971, %v972
  %v974 = vsel %vm847, %v384, -inf
  %v975 = vrot.slane %v974, 4
  %v976 = vmax.f32 %v974, %v975
  %v977 = vrot.slane %v976, 2
  %v978 = vmax.f32 %v976, %v977
  %v979 = vrot.slane %v978, 1
  %v980 = vmax.f32 %v978, %v979
  %v981 = vsel %vm847, %v385, -inf
  %v982 = vrot.slane %v981, 4
  %v983 = vmax.f32 %v981, %v982
  %v984 = vrot.slane %v983, 2
  %v985 = vmax.f32 %v983, %v984
  %v986 = vrot.slane %v985, 1
  %v987 = vmax.f32 %v985, %v986
  %v988 = vsel %vm847, %v386, -inf
  %v989 = vrot.slane %v988, 4
  %v990 = vmax.f32 %v988, %v989
  %v991 = vrot.slane %v990, 2
  %v992 = vmax.f32 %v990, %v991
  %v993 = vrot.slane %v992, 1
  %v994 = vmax.f32 %v992, %v993
  %v995 = vsel %vm847, %v387, -inf
  %v996 = vrot.slane %v995, 4
  %v997 = vmax.f32 %v995, %v996
  %v998 = vrot.slane %v997, 2
  %v999 = vmax.f32 %v997, %v998
  %v1000 = vrot.slane %v999, 1
  %v1001 = vmax.f32 %v999, %v1000
  %v1002 = vsel %vm847, %v388, -inf
  %v1003 = vrot.slane %v1002, 4
  %v1004 = vmax.f32 %v1002, %v1003
  %v1005 = vrot.slane %v1004, 2
  %v1006 = vmax.f32 %v1004, %v1005
  %v1007 = vrot.slane %v1006, 1
  %v1008 = vmax.f32 %v1006, %v1007
  %v1009 = vsel %vm847, %v389, -inf
  %v1010 = vrot.slane %v1009, 4
  %v1011 = vmax.f32 %v1009, %v1010
  %v1012 = vrot.slane %v1011, 2
  %v1013 = vmax.f32 %v1011, %v1012
  %v1014 = vrot.slane %v1013, 1
  %v1015 = vmax.f32 %v1013, %v1014
  %v1016 = vsel %vm847, %v390, -inf
  %v1017 = vrot.slane %v1016, 4
  %v1018 = vmax.f32 %v1016, %v1017
  %v1019 = vrot.slane %v1018, 2
  %v1020 = vmax.f32 %v1018, %v1019
  %v1021 = vrot.slane %v1020, 1
  %v1022 = vmax.f32 %v1020, %v1021
  %v1023 = vsel %vm847, %v391, -inf
  %v1024 = vrot.slane %v1023, 4
  %v1025 = vmax.f32 %v1023, %v1024
  %v1026 = vrot.slane %v1025, 2
  %v1027 = vmax.f32 %v1025, %v1026
  %v1028 = vrot.slane %v1027, 1
  %v1029 = vmax.f32 %v1027, %v1028
  %v1030 = vsel %vm847, %v392, -inf
  %v1031 = vrot.slane %v1030, 4
  %v1032 = vmax.f32 %v1030, %v1031
  %v1033 = vrot.slane %v1032, 2
  %v1034 = vmax.f32 %v1032, %v1033
  %v1035 = vrot.slane %v1034, 1
  %v1036 = vmax.f32 %v1034, %v1035
  %v1037 = vsel %vm847, %v393, -inf
  %v1038 = vrot.slane %v1037, 4
  %v1039 = vmax.f32 %v1037, %v1038
  %v1040 = vrot.slane %v1039, 2
  %v1041 = vmax.f32 %v1039, %v1040
  %v1042 = vrot.slane %v1041, 1
  %v1043 = vmax.f32 %v1041, %v1042
  %v1044 = vsel %vm847, %v394, -inf
  %v1045 = vrot.slane %v1044, 4
  %v1046 = vmax.f32 %v1044, %v1045
  %v1047 = vrot.slane %v1046, 2
  %v1048 = vmax.f32 %v1046, %v1047
  %v1049 = vrot.slane %v1048, 1
  %v1050 = vmax.f32 %v1048, %v1049
  %v1051 = vsel %vm847, %v395, -inf
  %v1052 = vrot.slane %v1051, 4
  %v1053 = vmax.f32 %v1051, %v1052
  %v1054 = vrot.slane %v1053, 2
  %v1055 = vmax.f32 %v1053, %v1054
  %v1056 = vrot.slane %v1055, 1
  %v1057 = vmax.f32 %v1055, %v1056
  %v1058 = vsel %vm847, %v396, -inf
  %v1059 = vrot.slane %v1058, 4
  %v1060 = vmax.f32 %v1058, %v1059
  %v1061 = vrot.slane %v1060, 2
  %v1062 = vmax.f32 %v1060, %v1061
  %v1063 = vrot.slane %v1062, 1
  %v1064 = vmax.f32 %v1062, %v1063
  %v1065 = vsel %vm847, %v397, -inf
  %v1066 = vrot.slane %v1065, 4
  %v1067 = vmax.f32 %v1065, %v1066
  %v1068 = vrot.slane %v1067, 2
  %v1069 = vmax.f32 %v1067, %v1068
  %v1070 = vrot.slane %v1069, 1
  %v1071 = vmax.f32 %v1069, %v1070
  %v1072 = vld [vmem:[%s2] sm:$0xff]
  %v1073 = vld [vmem:[%s2 + $0x8] sm:$0xff]
  %v1074 = vld [vmem:[%s2 + $0x10] sm:$0xff]
  %v1075 = vld [vmem:[%s2 + $0x18] sm:$0xff]
  %vm1076 = vcmp.gt.f32.partialorder %v1072, 0.0
  %vm1077 = vcmp.gt.f32.partialorder %v1073, 0.0
  %vm1078 = vcmp.gt.f32.partialorder %v1074, 0.0
  %vm1079 = vcmp.gt.f32.partialorder %v1075, 0.0
  %vm1080 = vcmp.gt.f32.partialorder %v854, 0.0
  %vm1081 = vcmp.gt.f32.partialorder %v861, 0.0
  %vm1082 = vcmp.gt.f32.partialorder %v868, 0.0
  %vm1083 = vcmp.gt.f32.partialorder %v875, 0.0
  %vm1084 = vcmp.gt.f32.partialorder %v882, 0.0
  %vm1085 = vcmp.gt.f32.partialorder %v889, 0.0
  %vm1086 = vcmp.gt.f32.partialorder %v896, 0.0
  %vm1087 = vcmp.gt.f32.partialorder %v903, 0.0
  %vm1088 = vcmp.gt.f32.partialorder %v910, 0.0
  %vm1089 = vcmp.gt.f32.partialorder %v917, 0.0
  %vm1090 = vcmp.gt.f32.partialorder %v924, 0.0
  %vm1091 = vcmp.gt.f32.partialorder %v931, 0.0
  %vm1092 = vcmp.gt.f32.partialorder %v938, 0.0
  %vm1093 = vcmp.gt.f32.partialorder %v945, 0.0
  %vm1094 = vcmp.gt.f32.partialorder %v952, 0.0
  %vm1095 = vcmp.gt.f32.partialorder %v959, 0.0
  %vm1096 = vcmp.gt.f32.partialorder %v966, 0.0
  %vm1097 = vcmp.gt.f32.partialorder %v973, 0.0
  %vm1098 = vcmp.gt.f32.partialorder %v980, 0.0
  %vm1099 = vcmp.gt.f32.partialorder %v987, 0.0
  %vm1100 = vcmp.gt.f32.partialorder %v994, 0.0
  %vm1101 = vcmp.gt.f32.partialorder %v1001, 0.0
  %vm1102 = vcmp.gt.f32.partialorder %v1008, 0.0
  %vm1103 = vcmp.gt.f32.partialorder %v1015, 0.0
  %vm1104 = vcmp.gt.f32.partialorder %v1022, 0.0
  %vm1105 = vcmp.gt.f32.partialorder %v1029, 0.0
  %vm1106 = vcmp.gt.f32.partialorder %v1036, 0.0
  %vm1107 = vcmp.gt.f32.partialorder %v1043, 0.0
  %vm1108 = vcmp.gt.f32.partialorder %v1050, 0.0
  %vm1109 = vcmp.gt.f32.partialorder %v1057, 0.0
  %vm1110 = vcmp.gt.f32.partialorder %v1064, 0.0
  %vm1111 = vcmp.gt.f32.partialorder %v1071, 0.0
  %v1112 = vsel %vm1080, 1, 0
  %v1113 = vsel %vm1081, 1, 0
  %v1114 = vsel %vm1082, 1, 0
  %v1115 = vsel %vm1083, 1, 0
  %v1116 = vsel %vm1084, 1, 0
  %v1117 = vsel %vm1085, 1, 0
  %v1118 = vsel %vm1086, 1, 0
  %v1119 = vsel %vm1087, 1, 0
  %v1120 = vsel %vm1088, 1, 0
  %v1121 = vsel %vm1089, 1, 0
  %v1122 = vsel %vm1090, 1, 0
  %v1123 = vsel %vm1091, 1, 0
  %v1124 = vsel %vm1092, 1, 0
  %v1125 = vsel %vm1093, 1, 0
  %v1126 = vsel %vm1094, 1, 0
  %v1127 = vsel %vm1095, 1, 0
  %v1128 = vsel %vm1096, 1, 0
  %v1129 = vsel %vm1097, 1, 0
  %v1130 = vsel %vm1098, 1, 0
  %v1131 = vsel %vm1099, 1, 0
  %v1132 = vsel %vm1100, 1, 0
  %v1133 = vsel %vm1101, 1, 0
  %v1134 = vsel %vm1102, 1, 0
  %v1135 = vsel %vm1103, 1, 0
  %v1136 = vsel %vm1104, 1, 0
  %v1137 = vsel %vm1105, 1, 0
  %v1138 = vsel %vm1106, 1, 0
  %v1139 = vsel %vm1107, 1, 0
  %v1140 = vsel %vm1108, 1, 0
  %v1141 = vsel %vm1109, 1, 0
  %v1142 = vsel %vm1110, 1, 0
  %v1143 = vsel %vm1111, 1, 0
  %vm1144 = vcmask 1041409
  %v1145 = vsel %vm1144, %v1113, %v1112
  %vm1146 = vcmask 1042434
  %v1147 = vsel %vm1146, %v1114, %v1145
  %vm1148 = vcmask 1043459
  %v1149 = vsel %vm1148, %v1115, %v1147
  %vm1150 = vcmask 1044484
  %v1151 = vsel %vm1150, %v1116, %v1149
  %vm1152 = vcmask 1045509
  %v1153 = vsel %vm1152, %v1117, %v1151
  %vm1154 = vcmask 1046534
  %v1155 = vsel %vm1154, %v1118, %v1153
  %vm1156 = vcmask 1047559
  %v1157 = vsel %vm1156, %v1119, %v1155
  %v1158 = vsel %vm1144, %v1121, %v1120
  %v1159 = vsel %vm1146, %v1122, %v1158
  %v1160 = vsel %vm1148, %v1123, %v1159
  %v1161 = vsel %vm1150, %v1124, %v1160
  %v1162 = vsel %vm1152, %v1125, %v1161
  %v1163 = vsel %vm1154, %v1126, %v1162
  %v1164 = vsel %vm1156, %v1127, %v1163
  %v1165 = vsel %vm1144, %v1129, %v1128
  %v1166 = vsel %vm1146, %v1130, %v1165
  %v1167 = vsel %vm1148, %v1131, %v1166
  %v1168 = vsel %vm1150, %v1132, %v1167
  %v1169 = vsel %vm1152, %v1133, %v1168
  %v1170 = vsel %vm1154, %v1134, %v1169
  %v1171 = vsel %vm1156, %v1135, %v1170
  %v1172 = vsel %vm1144, %v1137, %v1136
  %v1173 = vsel %vm1146, %v1138, %v1172
  %v1174 = vsel %vm1148, %v1139, %v1173
  %v1175 = vsel %vm1150, %v1140, %v1174
  %v1176 = vsel %vm1152, %v1141, %v1175
  %v1177 = vsel %vm1154, %v1142, %v1176
  %v1178 = vsel %vm1156, %v1143, %v1177
  %vm1179 = vcmp.ne.s32.totalorder %v1157, 0
  %vm1180 = vcmp.ne.s32.totalorder %v1164, 0
  %vm1181 = vcmp.ne.s32.totalorder %v1171, 0
  %vm1182 = vcmp.ne.s32.totalorder %v1178, 0
  %vm1183 = vmand %vm1076, %vm1179
  %vm1184 = vmand %vm1077, %vm1180
  %vm1185 = vmand %vm1078, %vm1181
  %vm1186 = vmand %vm1079, %vm1182
  %v1187 = vsel %vm1183, 1, 0
  %v1188 = vsel %vm1184, 1, 0
  %v1189 = vsel %vm1185, 1, 0
  %v1190 = vsel %vm1186, 1, 0
  %1191 = vset.pattern.permute.xlu0 0
  %1192 = vperm.xlu0 %1191, %v1187
  %v1193 = vpop.permute.xlu0 %1192
  %1194 = vset.pattern.permute.xlu0 0
  %1195 = vperm.xlu0 %1194, %v1188
  %v1196 = vpop.permute.xlu0 %1195
  %1197 = vset.pattern.permute.xlu0 0
  %1198 = vperm.xlu0 %1197, %v1189
  %v1199 = vpop.permute.xlu0 %1198
  %1200 = vset.pattern.permute.xlu0 0
  %1201 = vperm.xlu0 %1200, %v1190
  %v1202 = vpop.permute.xlu0 %1201
  %vm1203 = vcmp.eq.s32.totalorder %v1193, 1
  %vm1204 = vcmp.eq.s32.totalorder %v1196, 1
  %vm1205 = vcmp.eq.s32.totalorder %v1199, 1
  %vm1206 = vcmp.eq.s32.totalorder %v1202, 1
  %v1239 = vsel %vm1144, %v636, %v629
  %v1240 = vsel %vm1146, %v643, %v1239
  %v1241 = vsel %vm1148, %v650, %v1240
  %v1242 = vsel %vm1150, %v657, %v1241
  %v1243 = vsel %vm1152, %v664, %v1242
  %v1244 = vsel %vm1154, %v671, %v1243
  %v1245 = vsel %vm1156, %v678, %v1244
  %v1246 = vsel %vm1144, %v692, %v685
  %v1247 = vsel %vm1146, %v699, %v1246
  %v1248 = vsel %vm1148, %v706, %v1247
  %v1249 = vsel %vm1150, %v713, %v1248
  %v1250 = vsel %vm1152, %v720, %v1249
  %v1251 = vsel %vm1154, %v727, %v1250
  %v1252 = vsel %vm1156, %v734, %v1251
  %v1253 = vsel %vm1144, %v748, %v741
  %v1254 = vsel %vm1146, %v755, %v1253
  %v1255 = vsel %vm1148, %v762, %v1254
  %v1256 = vsel %vm1150, %v769, %v1255
  %v1257 = vsel %vm1152, %v776, %v1256
  %v1258 = vsel %vm1154, %v783, %v1257
  %v1259 = vsel %vm1156, %v790, %v1258
  %v1260 = vsel %vm1144, %v804, %v797
  %v1261 = vsel %vm1146, %v811, %v1260
  %v1262 = vsel %vm1148, %v818, %v1261
  %v1263 = vsel %vm1150, %v825, %v1262
  %v1264 = vsel %vm1152, %v832, %v1263
  %v1265 = vsel %vm1154, %v839, %v1264
  %v1266 = vsel %vm1156, %v846, %v1265
  %v1271 = vsel %vm1203, %v1245, 0.0
  %v1272 = vsel %vm1204, %v1252, 0.0
  %v1273 = vsel %vm1205, %v1259, 0.0
  %v1274 = vsel %vm1206, %v1266, 0.0
  %v1275 = vpack.c.bf16 %v1272, %v1271
  %v1276 = vpack.c.bf16 %v1274, %v1273
  %v1277 = vld [vmem:[%s5] sm:$0xff]
  %v1278 = vld [vmem:[%s5 + $0x8] sm:$0xff]
  %v1279 = vld [vmem:[%s5 + $0x10] sm:$0xff]
  %v1280 = vld [vmem:[%s5 + $0x18] sm:$0xff]
  %v1281 = vld [vmem:[%s6] sm:$0x3]
  %v1283 = vlaneseq
  %v1284 = vshrl.u32 %v1283, 7
  %v1285 = vsub.s32 0, %v1284
  %v1286 = vrot.slane %v1281, %v1285
  %v1287 = vlaneseq
  %v1288 = vshrl.u32 %v1287, 7
  %v1289 = vsub.s32 1, %v1288
  %v1290 = vrot.slane %v1281, %v1289
  %v1297 = vunpack.c.l.b16 %v1277
  %v1298 = vunpack.c.h.b16 %v1277
  %v1299 = vunpack.c.l.b16 %v1278
  %v1300 = vunpack.c.h.b16 %v1278
  %v1301 = vunpack.c.l.b16 %v1279
  %v1302 = vunpack.c.h.b16 %v1279
  %v1303 = vunpack.c.l.b16 %v1280
  %v1304 = vunpack.c.h.b16 %v1280
  %v1305 = vpack.c.b16 %v1299, %v1297
  %v1306 = vpack.c.b16 %v1300, %v1298
  %v1307 = vpack.c.b16 %v1303, %v1301
  %v1308 = vpack.c.b16 %v1304, %v1302
  %v1314 = vsel %vm622, %v1275, 0
  %v1317 = vsel %vm622, %v1276, 0
  %1319 = vmatprep.subr.bf16.mxu0 %v1306
  %1320 = vmatpush1.bf16.msra.mxu0 %v1305
  %1321 = vmatprep.subr.bf16.mxu0 %v1308
  %1322 = vmatpush1.bf16.msra.mxu0 %v1307
  %1323 = vmatprep.subr.bf16.mxu0 0
  %1324 = vmatpush1.bf16.msra.mxu0 0
  %1325 = vmatprep.subr.bf16.mxu0 0
  %1326 = vmatpush1.bf16.msra.mxu0 0
  %1327 = vmatprep.subr.bf16.mxu0 0
  %1328 = vmatpush1.bf16.msra.mxu0 0
  %1329 = vmatprep.subr.bf16.mxu0 0
  %1330 = vmatpush1.bf16.msra.mxu0 0
  %1331 = vmatprep.subr.bf16.mxu0 0
  %1332 = vmatpush1.bf16.msra.mxu0 0
  %1333 = vmatprep.subr.bf16.mxu0 0
  %1334 = vmatpush1.bf16.msra.mxu0 0
  %1335 = vmatprep.subr.bf16.mxu0 0
  %1336 = vmatpush1.bf16.msra.mxu0 0
  %1337 = vmatprep.subr.bf16.mxu0 0
  %1338 = vmatpush1.bf16.msra.mxu0 0
  %1339 = vmatprep.subr.bf16.mxu0 0
  %1340 = vmatpush1.bf16.msra.mxu0 0
  %1341 = vmatprep.subr.bf16.mxu0 0
  %1342 = vmatpush1.bf16.msra.mxu0 0
  %1343 = vmatprep.subr.bf16.mxu0 0
  %1344 = vmatpush1.bf16.msra.mxu0 0
  %1345 = vmatprep.subr.bf16.mxu0 0
  %1346 = vmatpush1.bf16.msra.mxu0 0
  %1347 = vmatprep.subr.bf16.mxu0 0
  %1348 = vmatpush1.bf16.msra.mxu0 0
  %1349 = vmatprep.subr.bf16.mxu0 0
  %1350 = vmatpush1.bf16.msra.mxu0 0
  %1351 = vmatprep.mubr.bf16.mxu0 0
  %1352 = vmatmul.mubr.bf16.gmra.mrb[0].mxu0 %v1314
  %v1353 = vpop.f32.mrb[0].mxu0
  %v1354 = vadd.f32 %v1286, %v1353
  %v1355 = vpop.f32.mrb[0].mxu0
  %v1356 = vadd.f32 %v1290, %v1355
  %v1357 = vpop.f32.mrb[0].mxu0
  %v1358 = vadd.f32 %v1286, %v1357
  %v1359 = vpop.f32.mrb[0].mxu0
  %v1360 = vadd.f32 %v1290, %v1359
  %1361 = vmatprep.mubr.bf16.mxu0 0
  %1362 = vmatmul.mubr.bf16.gmra.mrb[0].mxu0 %v1317
  %v1363 = vpop.f32.mrb[0].mxu0
  %v1364 = vadd.f32 %v1286, %v1363
  %v1365 = vpop.f32.mrb[0].mxu0
  %v1366 = vadd.f32 %v1290, %v1365
  %v1367 = vpop.f32.mrb[0].mxu0
  %v1368 = vadd.f32 %v1286, %v1367
  %v1369 = vpop.f32.mrb[0].mxu0
  %v1370 = vadd.f32 %v1290, %v1369
  %1371 = vdwg.mxu0
  %vm1372 = vcmask 785408
  %1373 = vst.msk [vmem:[%s7] sm:$0xff] %vm1372, %v1354
  %1374 = vst.msk [vmem:[%s7 + $0x8] sm:$0xff] %vm1372, %v1358
  %1375 = vst.msk [vmem:[%s7 + $0x10] sm:$0xff] %vm1372, %v1364
  %1376 = vst.msk [vmem:[%s7 + $0x18] sm:$0xff] %vm1372, %v1368
  %1385 = vrot.lane.b32.xlu0 %v1354, 32
  %v1386 = vpop.permute.xlu0 %1385
  %1387 = vrot.lane.b32.xlu0 %v1356, 32
  %v1388 = vpop.permute.xlu0 %1387
  %1389 = vrot.lane.b32.xlu0 %v1358, 32
  %v1390 = vpop.permute.xlu0 %1389
  %1391 = vrot.lane.b32.xlu0 %v1360, 32
  %v1392 = vpop.permute.xlu0 %1391
  %1393 = vrot.lane.b32.xlu0 %v1364, 32
  %v1394 = vpop.permute.xlu0 %1393
  %1395 = vrot.lane.b32.xlu0 %v1366, 32
  %v1396 = vpop.permute.xlu0 %1395
  %1397 = vrot.lane.b32.xlu0 %v1368, 32
  %v1398 = vpop.permute.xlu0 %1397
  %1399 = vrot.lane.b32.xlu0 %v1370, 32
  %v1400 = vpop.permute.xlu0 %1399
  %v1401 = vsel %vm622, %v1386, %v1388
  %v1402 = vsel %vm622, %v1390, %v1392
  %v1403 = vsel %vm622, %v1394, %v1396
  %v1404 = vsel %vm622, %v1398, %v1400
  %1409 = vst.msk [vmem:[%s8] sm:$0xff] %vm1372, %v1401
  %1410 = vst.msk [vmem:[%s8 + $0x8] sm:$0xff] %vm1372, %v1402
  %1411 = vst.msk [vmem:[%s8 + $0x10] sm:$0xff] %vm1372, %v1403
  %1412 = vst.msk [vmem:[%s8 + $0x18] sm:$0xff] %vm1372, %v1404
  // Predicated region
  $region30: #{batch_program_classifier_forward.3} parent=0 // pred_check
    _
  $region31: #{batch_program_classifier_forward.3} parent=0 // pred_check_branch
    %1414 = sbr.rel (0) target = $region33
  $region32: #{batch_program_classifier_forward.3} parent=0 // pred_region
    _
  $region33: #{batch_program_classifier_forward.3} parent=0 // pred_fallthru
    _
  // Predicated region
  $region34: #{batch_program_classifier_forward.3} parent=0 // pred_check
    _
  $region35: #{batch_program_classifier_forward.3} parent=0 // pred_check_branch
    %1416 = sbr.rel (0) target = $region37
  $region36: #{batch_program_classifier_forward.3} parent=0 // pred_region
    _
  $region37: #{batch_program_classifier_forward.3} parent=0 // pred_fallthru
    _
  // Predicated region
  $region38: #{batch_program_classifier_forward.3} parent=0 // pred_check
    _
  $region39: #{batch_program_classifier_forward.3} parent=0 // pred_check_branch
    %1418 = sbr.rel (0) target = $region41
  $region40: #{batch_program_classifier_forward.3} parent=0 // pred_region
    _
  $region41: #{batch_program_classifier_forward.3} parent=0 // pred_fallthru
    _
  // Predicated region
  $region42: #{batch_program_classifier_forward.3} parent=0 // pred_check
    _
  $region43: #{batch_program_classifier_forward.3} parent=0 // pred_check_branch
    %1420 = sbr.rel (0) target = $region45
  $region44: #{batch_program_classifier_forward.3} parent=0 // pred_region
    _
  $region45: #{batch_program_classifier_forward.3} parent=0 // pred_fallthru
    _

</llo_original>
